<compile_context>
chip_gen: v7x
topology: tpu7x:2x2x1
jax: 0.10.0
libtpu: 0.0.40
codegen_flags: <defaults>
</compile_context>

<pallas_src>
import functools
import math

import jax
import jax.numpy as jnp
from jax import lax
from jax.experimental import pallas as pl
from jax.experimental.pallas import tpu as pltpu


def _lstm_kernel(x_ref, h0_ref, c0_ref, wih_ref, whh_ref, b_ref,
                 y_ref, hN_ref, cN_ref, act_scr, gx_scr):
    """Fused multi-layer LSTM. grid = (n_layers,); time loop is inside the kernel."""
    layer = pl.program_id(0)
    n_layers = pl.num_programs(0)
    SB, Ipad = act_scr.shape
    B = h0_ref.shape[1]
    H = h0_ref.shape[2]
    S = SB // B

    # Layer 0 consumes the (zero-padded) input sequence; later layers consume the
    # previous layer's hidden states already sitting in act_scr (scratch persists
    # across grid iterations).
    @pl.when(layer == 0)
    def _():
        act_scr[...] = x_ref[...]

    # Hoisted input projection: one (S*B, Ipad) x (Ipad, 4H) GEMM per layer,
    # outside the sequential recurrence. Bias is pre-summed (b_ih + b_hh) and the
    # i/f/o columns of weights+bias are pre-scaled by 0.5 for the tanh-sigmoid trick.
    gx_scr[...] = (jnp.dot(act_scr[...], wih_ref[0],
                           preferred_element_type=jnp.float32)
                   + b_ref[0])

    w_hh = whh_ref[0]  # (H, 4H), columns pre-scaled like W_ih

    def step(t, carry):
        h_prev, c_prev = carry
        row = pl.multiple_of(t * B, B)
        # serial per-step work: one small matmul + elementwise gates
        g = (gx_scr[pl.ds(row, B), :]
             + jnp.dot(h_prev, w_hh, preferred_element_type=jnp.float32))
        # sigmoid(z) = 0.5*(tanh(z/2)+1); the /2 is already folded into the
        # weights/bias, so a single EUP tanh covers all four gates.
        tg = jnp.tanh(g)
        i_g = 0.5 * (tg[:, 0:H] + 1.0)
        f_g = 0.5 * (tg[:, H:2 * H] + 1.0)
        g_g = tg[:, 2 * H:3 * H]
        o_g = 0.5 * (tg[:, 3 * H:4 * H] + 1.0)
        c_new = f_g * c_prev + i_g * g_g
        h_new = o_g * jnp.tanh(c_new)
        # Stash hidden state for the next layer. If Ipad > H the stale columns
        # H:Ipad are multiplied by zero-padded weight rows, so they are harmless.
        if Ipad == H:
            act_scr[pl.ds(row, B), :] = h_new
        else:
            act_scr[pl.ds(row, B), 0:H] = h_new
        return h_new, c_new

    hN, cN = lax.fori_loop(0, S, step, (h0_ref[0], c0_ref[0]), unroll=True)
    hN_ref[0] = hN
    cN_ref[0] = cN

    # Single slab write-back of the last layer's outputs (lane-dense, one DMA).
    @pl.when(layer == n_layers - 1)
    def _():
        if Ipad == H:
            y_ref[...] = act_scr[...]
        else:
            y_ref[...] = act_scr[:, 0:H]


@jax.jit
def _lstm_forward(x, h, c, wih_all, whh_all, b_all):
    """x: (B, S, I) batch-first; h/c: (L, B, H). Returns (output, (h_n, c_n))."""
    B, S, I = x.shape
    L, Ipad, H4 = wih_all.shape
    H = H4 // 4

    # time-major + pad feature dim to the layer-fused width, then flatten to 2D
    x_sb = jnp.transpose(x, (1, 0, 2)).astype(jnp.float32)     # (S, B, I)
    if Ipad > I:
        x_sb = jnp.pad(x_sb, ((0, 0), (0, 0), (0, Ipad - I)))
    x2d = x_sb.reshape(S * B, Ipad)
    h = h.astype(jnp.float32)
    c = c.astype(jnp.float32)

    y2d, h_n, c_n = pl.pallas_call(
        _lstm_kernel,
        out_shape=(jax.ShapeDtypeStruct((S * B, H), jnp.float32),
                   jax.ShapeDtypeStruct((L, B, H), jnp.float32),
                   jax.ShapeDtypeStruct((L, B, H), jnp.float32)),
        grid_spec=pltpu.PrefetchScalarGridSpec(
            num_scalar_prefetch=0,
            grid=(L,),                                          # layers (sequential)
            in_specs=[
                pl.BlockSpec((S * B, Ipad), lambda l: (0, 0)),      # x (resident)
                pl.BlockSpec((1, B, H), lambda l: (l, 0, 0)),       # h0[l]
                pl.BlockSpec((1, B, H), lambda l: (l, 0, 0)),       # c0[l]
                pl.BlockSpec((1, Ipad, H4), lambda l: (l, 0, 0)),   # W_ih^T[l] (pre-scaled)
                pl.BlockSpec((1, H, H4), lambda l: (l, 0, 0)),      # W_hh^T[l] (pre-scaled)
                pl.BlockSpec((1, 1, H4), lambda l: (l, 0, 0)),      # bias[l]
            ],
            out_specs=[
                pl.BlockSpec((S * B, H), lambda l: (0, 0)),         # y (resident, written once)
                pl.BlockSpec((1, B, H), lambda l: (l, 0, 0)),       # h_n[l]
                pl.BlockSpec((1, B, H), lambda l: (l, 0, 0)),       # c_n[l]
            ],
            scratch_shapes=[
                pltpu.VMEM((S * B, Ipad), jnp.float32),             # current layer input
                pltpu.VMEM((S * B, H4), jnp.float32),               # hoisted x-projection
            ]),
        compiler_params=pltpu.CompilerParams(
            dimension_semantics=("arbitrary",)),                    # layers carry state
    )(x2d, h, c, wih_all, whh_all, b_all)

    output = y2d.reshape(S, B, H).transpose(1, 0, 2)                # back to batch_first
    return output, (h_n, c_n)


class PallasRNN:
    """Mirror of the PyTorch RNN module: nn.LSTM(input_size, hidden_dim, n_layers, batch_first=True)."""

    def __init__(self, input_size, hidden_dim, n_layers, key):
        self.hidden_dim = hidden_dim
        self.n_layers = n_layers
        self.input_size = input_size
        H = hidden_dim
        k = 1.0 / math.sqrt(H)  # PyTorch default uniform(-k, k)

        # PyTorch-layout parameters (kept for the pure-JAX reference check).
        self.params = []
        for layer in range(n_layers):
            in_dim = input_size if layer == 0 else H
            key, k1, k2, k3, k4 = jax.random.split(key, 5)
            w_ih = jax.random.uniform(k1, (4 * H, in_dim), jnp.float32, -k, k)
            w_hh = jax.random.uniform(k2, (4 * H, H), jnp.float32, -k, k)
            b_ih = jax.random.uniform(k3, (4 * H,), jnp.float32, -k, k)
            b_hh = jax.random.uniform(k4, (4 * H,), jnp.float32, -k, k)
            self.params.append((w_ih, w_hh, b_ih, b_hh))

        # One-time kernel prep (hoisted out of the forward pass):
        #  - transpose weights, sum biases
        #  - scale i/f/o gate columns by 0.5 (sigmoid(z) = 0.5*(tanh(z/2)+1))
        #  - zero-pad layer-0 W_ih rows so all layers share one (Ipad, 4H) shape
        Ipad = max(input_size, H)
        scale = jnp.concatenate([
            jnp.full((H,), 0.5, jnp.float32),   # i
            jnp.full((H,), 0.5, jnp.float32),   # f
            jnp.ones((H,), jnp.float32),        # g (tanh gate: no scaling)
            jnp.full((H,), 0.5, jnp.float32),   # o
        ])
        wih_l, whh_l, b_l = [], [], []
        for (w_ih, w_hh, b_ih, b_hh) in self.params:
            in_dim = w_ih.shape[1]
            wih_t = (w_ih.T * scale[None, :]).astype(jnp.float32)      # (in_dim, 4H)
            wih_t = jnp.pad(wih_t, ((0, Ipad - in_dim), (0, 0)))       # (Ipad, 4H)
            whh_t = (w_hh.T * scale[None, :]).astype(jnp.float32)      # (H, 4H)
            bias = ((b_ih + b_hh) * scale).reshape(1, 4 * H).astype(jnp.float32)
            wih_l.append(wih_t)
            whh_l.append(whh_t)
            b_l.append(bias)
        self.wih_all = jnp.stack(wih_l, 0)   # (L, Ipad, 4H)
        self.whh_all = jnp.stack(whh_l, 0)   # (L, H, 4H)
        self.b_all = jnp.stack(b_l, 0)       # (L, 1, 4H)
        self.in_pad = Ipad

    def __call__(self, x, h, c):
        # x: (B, S, input_size), h/c: (n_layers, B, hidden_dim)
        return _lstm_forward(x, h, c, self.wih_all, self.whh_all, self.b_all)


def _reference_lstm(x, h, c, params):
    """Pure-JAX reference (lax.scan), PyTorch LSTM semantics, for a correctness check."""
    x_sbi = jnp.transpose(x, (1, 0, 2)).astype(jnp.float32)
    h_finals, c_finals = [], []
    for layer, (w_ih, w_hh, b_ih, b_hh) in enumerate(params):
        H = w_hh.shape[1]

        def step(carry, x_t):
            h_prev, c_prev = carry
            g = x_t @ w_ih.T + b_ih + h_prev @ w_hh.T + b_hh
            i_g = jax.nn.sigmoid(g[:, 0:H])
            f_g = jax.nn.sigmoid(g[:, H:2 * H])
            g_g = jnp.tanh(g[:, 2 * H:3 * H])
            o_g = jax.nn.sigmoid(g[:, 3 * H:4 * H])
            c_new = f_g * c_prev + i_g * g_g
            h_new = o_g * jnp.tanh(c_new)
            return (h_new, c_new), h_new

        (hN, cN), ys = lax.scan(step, (h[layer], c[layer]), x_sbi)
        x_sbi = ys
        h_finals.append(hN)
        c_finals.append(cN)
    return (jnp.transpose(x_sbi, (1, 0, 2)),
            (jnp.stack(h_finals, 0), jnp.stack(c_finals, 0)))


if __name__ == "__main__":
    batch, seq, input_size, hidden_dim, n_layers = 2, 8, 16, 32, 2

    key = jax.random.PRNGKey(0)
    key, kx, kh, kc, kp = jax.random.split(key, 5)
    x = jax.random.normal(kx, (batch, seq, input_size), jnp.float32)
    h0 = jax.random.normal(kh, (n_layers, batch, hidden_dim), jnp.float32)
    c0 = jax.random.normal(kc, (n_layers, batch, hidden_dim), jnp.float32)

    model = PallasRNN(input_size, hidden_dim, n_layers, kp)

    out, (h_n, c_n) = model(x, h0, c0)
    jax.block_until_ready((out, h_n, c_n))

    # sanity check vs pure-JAX reference
    ref_out, (ref_h, ref_c) = _reference_lstm(x, h0, c0, model.params)
    assert out.shape == (batch, seq, hidden_dim)
    assert h_n.shape == (n_layers, batch, hidden_dim)
    assert c_n.shape == (n_layers, batch, hidden_dim)
    assert jnp.allclose(out, ref_out, atol=1e-4, rtol=1e-4)
    assert jnp.allclose(h_n, ref_h, atol=1e-4, rtol=1e-4)
    assert jnp.allclose(c_n, ref_c, atol=1e-4, rtol=1e-4)

    print("KERNEL_OK")
</pallas_src>

<mosaic_0001>
module attributes {stable_mosaic.version = 11 : i64} {
  func.func @_lstm_kernel(%arg0: i32, %arg1: memref<16x32xf32, #tpu.memory_space<vmem>>, %arg2: memref<1x2x32xf32, #tpu.memory_space<vmem>>, %arg3: memref<1x2x32xf32, #tpu.memory_space<vmem>>, %arg4: memref<1x32x128xf32, #tpu.memory_space<vmem>>, %arg5: memref<1x32x128xf32, #tpu.memory_space<vmem>>, %arg6: memref<1x1x128xf32, #tpu.memory_space<vmem>>, %arg7: memref<16x32xf32, #tpu.memory_space<vmem>>, %arg8: memref<1x2x32xf32, #tpu.memory_space<vmem>>, %arg9: memref<1x2x32xf32, #tpu.memory_space<vmem>>, %arg10: memref<16x32xf32, #tpu.memory_space<vmem>>, %arg11: memref<16x128xf32, #tpu.memory_space<vmem>>) attributes {dimension_semantics = [#tpu.dimension_semantics<arbitrary>], iteration_bounds = array<i64: 2>, scalar_prefetch = 0 : i64, scratch_operands = 2 : i64, tpu.core_type = #tpu.core_type<tc>, window_params = [{pipeline_mode = #tpu.pipeline_mode<synchronous>, transform_indices = @transform_0, window_bounds = array<i64: 16, 32>}, {transform_indices = @transform_1, window_bounds = array<i64: 1, 2, 32>}, {transform_indices = @transform_2, window_bounds = array<i64: 1, 2, 32>}, {transform_indices = @transform_3, window_bounds = array<i64: 1, 32, 128>}, {transform_indices = @transform_4, window_bounds = array<i64: 1, 32, 128>}, {transform_indices = @transform_5, window_bounds = array<i64: 1, 1, 128>}, {pipeline_mode = #tpu.pipeline_mode<synchronous>, transform_indices = @transform_6, window_bounds = array<i64: 16, 32>}, {transform_indices = @transform_7, window_bounds = array<i64: 1, 2, 32>}, {transform_indices = @transform_8, window_bounds = array<i64: 1, 2, 32>}]} {
    %c0_i32 = arith.constant 0 : i32
    %0 = arith.cmpi eq, %arg0, %c0_i32 : i32
    %1 = arith.extui %0 : i1 to i32
    %c0_i32_0 = arith.constant 0 : i32
    %2 = arith.cmpi ne, %1, %c0_i32_0 : i32
    scf.if %2 {
      %c0_108 = arith.constant 0 : index
      %c0_109 = arith.constant 0 : index
      %267 = vector.load %arg1[%c0_108, %c0_109] : memref<16x32xf32, #tpu.memory_space<vmem>>, vector<16x32xf32>
      %c0_110 = arith.constant 0 : index
      %c0_111 = arith.constant 0 : index
      %268 = vector.load %arg10[%c0_110, %c0_111] : memref<16x32xf32, #tpu.memory_space<vmem>>, vector<16x32xf32>
      tpu.vector_store %arg10[%c0_110, %c0_111], %267 {strides = array<i32>} : memref<16x32xf32, #tpu.memory_space<vmem>>, vector<16x32xf32>,
    } else {
    }
    %c0 = arith.constant 0 : index
    %c0_1 = arith.constant 0 : index
    %3 = vector.load %arg10[%c0, %c0_1] : memref<16x32xf32, #tpu.memory_space<vmem>>, vector<16x32xf32>
    %c0_2 = arith.constant 0 : index
    %c0_3 = arith.constant 0 : index
    %c0_4 = arith.constant 0 : index
    %4 = vector.load %arg4[%c0_2, %c0_3, %c0_4] : memref<1x32x128xf32, #tpu.memory_space<vmem>>, vector<1x32x128xf32>
    %5 = vector.shape_cast %4 : vector<1x32x128xf32> to vector<32x128xf32>
    %cst = arith.constant dense<0.000000e+00> : vector<16x128xf32>
    %6 = tpu.matmul %3, %5, %cst {dimension_numbers = #tpu.dot_dimension_numbers<[1], [0], [0], [1], [0, 0, 1, 1], [], []>} : vector<16x32xf32>, vector<32x128xf32>, vector<16x128xf32> -> vector<16x128xf32>
    %c0_5 = arith.constant 0 : index
    %c0_6 = arith.constant 0 : index
    %c0_7 = arith.constant 0 : index
    %7 = vector.load %arg6[%c0_5, %c0_6, %c0_7] : memref<1x1x128xf32, #tpu.memory_space<vmem>>, vector<1x1x128xf32>
    %8 = vector.shape_cast %7 : vector<1x1x128xf32> to vector<1x128xf32>
    %9 = vector.broadcast %8 : vector<1x128xf32> to vector<16x128xf32>
    %10 = arith.addf %6, %9 : vector<16x128xf32>
    %c0_8 = arith.constant 0 : index
    %c0_9 = arith.constant 0 : index
    %11 = vector.load %arg11[%c0_8, %c0_9] : memref<16x128xf32, #tpu.memory_space<vmem>>, vector<16x128xf32>
    tpu.vector_store %arg11[%c0_8, %c0_9], %10 {strides = array<i32>} : memref<16x128xf32, #tpu.memory_space<vmem>>, vector<16x128xf32>,
    %c0_10 = arith.constant 0 : index
    %c0_11 = arith.constant 0 : index
    %c0_12 = arith.constant 0 : index
    %12 = vector.load %arg5[%c0_10, %c0_11, %c0_12] : memref<1x32x128xf32, #tpu.memory_space<vmem>>, vector<1x32x128xf32>
    %13 = vector.shape_cast %12 : vector<1x32x128xf32> to vector<32x128xf32>
    %c0_13 = arith.constant 0 : index
    %c0_14 = arith.constant 0 : index
    %c0_15 = arith.constant 0 : index
    %14 = vector.load %arg2[%c0_13, %c0_14, %c0_15] : memref<1x2x32xf32, #tpu.memory_space<vmem>>, vector<1x2x32xf32>
    %15 = vector.shape_cast %14 : vector<1x2x32xf32> to vector<2x32xf32>
    %c0_16 = arith.constant 0 : index
    %c0_17 = arith.constant 0 : index
    %c0_18 = arith.constant 0 : index
    %16 = vector.load %arg3[%c0_16, %c0_17, %c0_18] : memref<1x2x32xf32, #tpu.memory_space<vmem>>, vector<1x2x32xf32>
    %17 = vector.shape_cast %16 : vector<1x2x32xf32> to vector<2x32xf32>
    %c0_i32_19 = arith.constant 0 : i32
    %c2_i32 = arith.constant 2 : i32
    %18 = arith.muli %c0_i32_19, %c2_i32 : i32
    %19 = tpu.assume_multiple %18, 2 : i32
    %20 = arith.index_cast %19 : i32 to index
    %c0_20 = arith.constant 0 : index
    %21 = vector.load %arg11[%20, %c0_20] : memref<16x128xf32, #tpu.memory_space<vmem>>, vector<2x128xf32>
    %cst_21 = arith.constant dense<0.000000e+00> : vector<2x128xf32>
    %22 = tpu.matmul %15, %13, %cst_21 {dimension_numbers = #tpu.dot_dimension_numbers<[1], [0], [0], [1], [0, 0, 1, 1], [], []>} : vector<2x32xf32>, vector<32x128xf32>, vector<2x128xf32> -> vector<2x128xf32>
    %23 = arith.addf %21, %22 : vector<2x128xf32>
    %24 = math.tanh %23 : vector<2x128xf32>
    %25 = vector.extract_strided_slice %24 {offsets = [0, 0], sizes = [2, 32], strides = [1, 1]} : vector<2x128xf32> to vector<2x32xf32>
    %cst_22 = arith.constant 1.000000e+00 : f32
    %26 = vector.broadcast %cst_22 : f32 to vector<2x32xf32>
    %27 = arith.addf %25, %26 : vector<2x32xf32>
    %cst_23 = arith.constant 5.000000e-01 : f32
    %28 = vector.broadcast %cst_23 : f32 to vector<2x32xf32>
    %29 = arith.mulf %28, %27 : vector<2x32xf32>
    %30 = vector.extract_strided_slice %24 {offsets = [0, 32], sizes = [2, 32], strides = [1, 1]} : vector<2x128xf32> to vector<2x32xf32>
    %cst_24 = arith.constant 1.000000e+00 : f32
    %31 = vector.broadcast %cst_24 : f32 to vector<2x32xf32>
    %32 = arith.addf %30, %31 : vector<2x32xf32>
    %cst_25 = arith.constant 5.000000e-01 : f32
    %33 = vector.broadcast %cst_25 : f32 to vector<2x32xf32>
    %34 = arith.mulf %33, %32 : vector<2x32xf32>
    %35 = vector.extract_strided_slice %24 {offsets = [0, 64], sizes = [2, 32], strides = [1, 1]} : vector<2x128xf32> to vector<2x32xf32>
    %36 = vector.extract_strided_slice %24 {offsets = [0, 96], sizes = [2, 32], strides = [1, 1]} : vector<2x128xf32> to vector<2x32xf32>
    %cst_26 = arith.constant 1.000000e+00 : f32
    %37 = vector.broadcast %cst_26 : f32 to vector<2x32xf32>
    %38 = arith.addf %36, %37 : vector<2x32xf32>
    %cst_27 = arith.constant 5.000000e-01 : f32
    %39 = vector.broadcast %cst_27 : f32 to vector<2x32xf32>
    %40 = arith.mulf %39, %38 : vector<2x32xf32>
    %41 = arith.mulf %34, %17 : vector<2x32xf32>
    %42 = arith.mulf %29, %35 : vector<2x32xf32>
    %43 = arith.addf %41, %42 : vector<2x32xf32>
    %44 = math.tanh %43 : vector<2x32xf32>
    %45 = arith.mulf %40, %44 : vector<2x32xf32>
    %46 = arith.index_cast %19 : i32 to index
    %c0_28 = arith.constant 0 : index
    %47 = vector.load %arg10[%46, %c0_28] : memref<16x32xf32, #tpu.memory_space<vmem>>, vector<2x32xf32>
    tpu.vector_store %arg10[%46, %c0_28], %45 {strides = array<i32>} : memref<16x32xf32, #tpu.memory_space<vmem>>, vector<2x32xf32>,
    %c1_i32 = arith.constant 1 : i32
    %c2_i32_29 = arith.constant 2 : i32
    %48 = arith.muli %c1_i32, %c2_i32_29 : i32
    %49 = tpu.assume_multiple %48, 2 : i32
    %50 = arith.index_cast %49 : i32 to index
    %c0_30 = arith.constant 0 : index
    %51 = vector.load %arg11[%50, %c0_30] : memref<16x128xf32, #tpu.memory_space<vmem>>, vector<2x128xf32>
    %cst_31 = arith.constant dense<0.000000e+00> : vector<2x128xf32>
    %52 = tpu.matmul %45, %13, %cst_31 {dimension_numbers = #tpu.dot_dimension_numbers<[1], [0], [0], [1], [0, 0, 1, 1], [], []>} : vector<2x32xf32>, vector<32x128xf32>, vector<2x128xf32> -> vector<2x128xf32>
    %53 = arith.addf %51, %52 : vector<2x128xf32>
    %54 = math.tanh %53 : vector<2x128xf32>
    %55 = vector.extract_strided_slice %54 {offsets = [0, 0], sizes = [2, 32], strides = [1, 1]} : vector<2x128xf32> to vector<2x32xf32>
    %cst_32 = arith.constant 1.000000e+00 : f32
    %56 = vector.broadcast %cst_32 : f32 to vector<2x32xf32>
    %57 = arith.addf %55, %56 : vector<2x32xf32>
    %cst_33 = arith.constant 5.000000e-01 : f32
    %58 = vector.broadcast %cst_33 : f32 to vector<2x32xf32>
    %59 = arith.mulf %58, %57 : vector<2x32xf32>
    %60 = vector.extract_strided_slice %54 {offsets = [0, 32], sizes = [2, 32], strides = [1, 1]} : vector<2x128xf32> to vector<2x32xf32>
    %cst_34 = arith.constant 1.000000e+00 : f32
    %61 = vector.broadcast %cst_34 : f32 to vector<2x32xf32>
    %62 = arith.addf %60, %61 : vector<2x32xf32>
    %cst_35 = arith.constant 5.000000e-01 : f32
    %63 = vector.broadcast %cst_35 : f32 to vector<2x32xf32>
    %64 = arith.mulf %63, %62 : vector<2x32xf32>
    %65 = vector.extract_strided_slice %54 {offsets = [0, 64], sizes = [2, 32], strides = [1, 1]} : vector<2x128xf32> to vector<2x32xf32>
    %66 = vector.extract_strided_slice %54 {offsets = [0, 96], sizes = [2, 32], strides = [1, 1]} : vector<2x128xf32> to vector<2x32xf32>
    %cst_36 = arith.constant 1.000000e+00 : f32
    %67 = vector.broadcast %cst_36 : f32 to vector<2x32xf32>
    %68 = arith.addf %66, %67 : vector<2x32xf32>
    %cst_37 = arith.constant 5.000000e-01 : f32
    %69 = vector.broadcast %cst_37 : f32 to vector<2x32xf32>
    %70 = arith.mulf %69, %68 : vector<2x32xf32>
    %71 = arith.mulf %64, %43 : vector<2x32xf32>
    %72 = arith.mulf %59, %65 : vector<2x32xf32>
    %73 = arith.addf %71, %72 : vector<2x32xf32>
    %74 = math.tanh %73 : vector<2x32xf32>
    %75 = arith.mulf %70, %74 : vector<2x32xf32>
    %76 = arith.index_cast %49 : i32 to index
    %c0_38 = arith.constant 0 : index
    %77 = vector.load %arg10[%76, %c0_38] : memref<16x32xf32, #tpu.memory_space<vmem>>, vector<2x32xf32>
    tpu.vector_store %arg10[%76, %c0_38], %75 {strides = array<i32>} : memref<16x32xf32, #tpu.memory_space<vmem>>, vector<2x32xf32>,
    %c2_i32_39 = arith.constant 2 : i32
    %c2_i32_40 = arith.constant 2 : i32
    %78 = arith.muli %c2_i32_39, %c2_i32_40 : i32
    %79 = tpu.assume_multiple %78, 2 : i32
    %80 = arith.index_cast %79 : i32 to index
    %c0_41 = arith.constant 0 : index
    %81 = vector.load %arg11[%80, %c0_41] : memref<16x128xf32, #tpu.memory_space<vmem>>, vector<2x128xf32>
    %cst_42 = arith.constant dense<0.000000e+00> : vector<2x128xf32>
    %82 = tpu.matmul %75, %13, %cst_42 {dimension_numbers = #tpu.dot_dimension_numbers<[1], [0], [0], [1], [0, 0, 1, 1], [], []>} : vector<2x32xf32>, vector<32x128xf32>, vector<2x128xf32> -> vector<2x128xf32>
    %83 = arith.addf %81, %82 : vector<2x128xf32>
    %84 = math.tanh %83 : vector<2x128xf32>
    %85 = vector.extract_strided_slice %84 {offsets = [0, 0], sizes = [2, 32], strides = [1, 1]} : vector<2x128xf32> to vector<2x32xf32>
    %cst_43 = arith.constant 1.000000e+00 : f32
    %86 = vector.broadcast %cst_43 : f32 to vector<2x32xf32>
    %87 = arith.addf %85, %86 : vector<2x32xf32>
    %cst_44 = arith.constant 5.000000e-01 : f32
    %88 = vector.broadcast %cst_44 : f32 to vector<2x32xf32>
    %89 = arith.mulf %88, %87 : vector<2x32xf32>
    %90 = vector.extract_strided_slice %84 {offsets = [0, 32], sizes = [2, 32], strides = [1, 1]} : vector<2x128xf32> to vector<2x32xf32>
    %cst_45 = arith.constant 1.000000e+00 : f32
    %91 = vector.broadcast %cst_45 : f32 to vector<2x32xf32>
    %92 = arith.addf %90, %91 : vector<2x32xf32>
    %cst_46 = arith.constant 5.000000e-01 : f32
    %93 = vector.broadcast %cst_46 : f32 to vector<2x32xf32>
    %94 = arith.mulf %93, %92 : vector<2x32xf32>
    %95 = vector.extract_strided_slice %84 {offsets = [0, 64], sizes = [2, 32], strides = [1, 1]} : vector<2x128xf32> to vector<2x32xf32>
    %96 = vector.extract_strided_slice %84 {offsets = [0, 96], sizes = [2, 32], strides = [1, 1]} : vector<2x128xf32> to vector<2x32xf32>
    %cst_47 = arith.constant 1.000000e+00 : f32
    %97 = vector.broadcast %cst_47 : f32 to vector<2x32xf32>
    %98 = arith.addf %96, %97 : vector<2x32xf32>
    %cst_48 = arith.constant 5.000000e-01 : f32
    %99 = vector.broadcast %cst_48 : f32 to vector<2x32xf32>
    %100 = arith.mulf %99, %98 : vector<2x32xf32>
    %101 = arith.mulf %94, %73 : vector<2x32xf32>
    %102 = arith.mulf %89, %95 : vector<2x32xf32>
    %103 = arith.addf %101, %102 : vector<2x32xf32>
    %104 = math.tanh %103 : vector<2x32xf32>
    %105 = arith.mulf %100, %104 : vector<2x32xf32>
    %106 = arith.index_cast %79 : i32 to index
    %c0_49 = arith.constant 0 : index
    %107 = vector.load %arg10[%106, %c0_49] : memref<16x32xf32, #tpu.memory_space<vmem>>, vector<2x32xf32>
    tpu.vector_store %arg10[%106, %c0_49], %105 {strides = array<i32>} : memref<16x32xf32, #tpu.memory_space<vmem>>, vector<2x32xf32>,
    %c3_i32 = arith.constant 3 : i32
    %c2_i32_50 = arith.constant 2 : i32
    %108 = arith.muli %c3_i32, %c2_i32_50 : i32
    %109 = tpu.assume_multiple %108, 2 : i32
    %110 = arith.index_cast %109 : i32 to index
    %c0_51 = arith.constant 0 : index
    %111 = vector.load %arg11[%110, %c0_51] : memref<16x128xf32, #tpu.memory_space<vmem>>, vector<2x128xf32>
    %cst_52 = arith.constant dense<0.000000e+00> : vector<2x128xf32>
    %112 = tpu.matmul %105, %13, %cst_52 {dimension_numbers = #tpu.dot_dimension_numbers<[1], [0], [0], [1], [0, 0, 1, 1], [], []>} : vector<2x32xf32>, vector<32x128xf32>, vector<2x128xf32> -> vector<2x128xf32>
    %113 = arith.addf %111, %112 : vector<2x128xf32>
    %114 = math.tanh %113 : vector<2x128xf32>
    %115 = vector.extract_strided_slice %114 {offsets = [0, 0], sizes = [2, 32], strides = [1, 1]} : vector<2x128xf32> to vector<2x32xf32>
    %cst_53 = arith.constant 1.000000e+00 : f32
    %116 = vector.broadcast %cst_53 : f32 to vector<2x32xf32>
    %117 = arith.addf %115, %116 : vector<2x32xf32>
    %cst_54 = arith.constant 5.000000e-01 : f32
    %118 = vector.broadcast %cst_54 : f32 to vector<2x32xf32>
    %119 = arith.mulf %118, %117 : vector<2x32xf32>
    %120 = vector.extract_strided_slice %114 {offsets = [0, 32], sizes = [2, 32], strides = [1, 1]} : vector<2x128xf32> to vector<2x32xf32>
    %cst_55 = arith.constant 1.000000e+00 : f32
    %121 = vector.broadcast %cst_55 : f32 to vector<2x32xf32>
    %122 = arith.addf %120, %121 : vector<2x32xf32>
    %cst_56 = arith.constant 5.000000e-01 : f32
    %123 = vector.broadcast %cst_56 : f32 to vector<2x32xf32>
    %124 = arith.mulf %123, %122 : vector<2x32xf32>
    %125 = vector.extract_strided_slice %114 {offsets = [0, 64], sizes = [2, 32], strides = [1, 1]} : vector<2x128xf32> to vector<2x32xf32>
    %126 = vector.extract_strided_slice %114 {offsets = [0, 96], sizes = [2, 32], strides = [1, 1]} : vector<2x128xf32> to vector<2x32xf32>
    %cst_57 = arith.constant 1.000000e+00 : f32
    %127 = vector.broadcast %cst_57 : f32 to vector<2x32xf32>
    %128 = arith.addf %126, %127 : vector<2x32xf32>
    %cst_58 = arith.constant 5.000000e-01 : f32
    %129 = vector.broadcast %cst_58 : f32 to vector<2x32xf32>
    %130 = arith.mulf %129, %128 : vector<2x32xf32>
    %131 = arith.mulf %124, %103 : vector<2x32xf32>
    %132 = arith.mulf %119, %125 : vector<2x32xf32>
    %133 = arith.addf %131, %132 : vector<2x32xf32>
    %134 = math.tanh %133 : vector<2x32xf32>
    %135 = arith.mulf %130, %134 : vector<2x32xf32>
    %136 = arith.index_cast %109 : i32 to index
    %c0_59 = arith.constant 0 : index
    %137 = vector.load %arg10[%136, %c0_59] : memref<16x32xf32, #tpu.memory_space<vmem>>, vector<2x32xf32>
    tpu.vector_store %arg10[%136, %c0_59], %135 {strides = array<i32>} : memref<16x32xf32, #tpu.memory_space<vmem>>, vector<2x32xf32>,
    %c4_i32 = arith.constant 4 : i32
    %c2_i32_60 = arith.constant 2 : i32
    %138 = arith.muli %c4_i32, %c2_i32_60 : i32
    %139 = tpu.assume_multiple %138, 2 : i32
    %140 = arith.index_cast %139 : i32 to index
    %c0_61 = arith.constant 0 : index
    %141 = vector.load %arg11[%140, %c0_61] : memref<16x128xf32, #tpu.memory_space<vmem>>, vector<2x128xf32>
    %cst_62 = arith.constant dense<0.000000e+00> : vector<2x128xf32>
    %142 = tpu.matmul %135, %13, %cst_62 {dimension_numbers = #tpu.dot_dimension_numbers<[1], [0], [0], [1], [0, 0, 1, 1], [], []>} : vector<2x32xf32>, vector<32x128xf32>, vector<2x128xf32> -> vector<2x128xf32>
    %143 = arith.addf %141, %142 : vector<2x128xf32>
    %144 = math.tanh %143 : vector<2x128xf32>
    %145 = vector.extract_strided_slice %144 {offsets = [0, 0], sizes = [2, 32], strides = [1, 1]} : vector<2x128xf32> to vector<2x32xf32>
    %cst_63 = arith.constant 1.000000e+00 : f32
    %146 = vector.broadcast %cst_63 : f32 to vector<2x32xf32>
    %147 = arith.addf %145, %146 : vector<2x32xf32>
    %cst_64 = arith.constant 5.000000e-01 : f32
    %148 = vector.broadcast %cst_64 : f32 to vector<2x32xf32>
    %149 = arith.mulf %148, %147 : vector<2x32xf32>
    %150 = vector.extract_strided_slice %144 {offsets = [0, 32], sizes = [2, 32], strides = [1, 1]} : vector<2x128xf32> to vector<2x32xf32>
    %cst_65 = arith.constant 1.000000e+00 : f32
    %151 = vector.broadcast %cst_65 : f32 to vector<2x32xf32>
    %152 = arith.addf %150, %151 : vector<2x32xf32>
    %cst_66 = arith.constant 5.000000e-01 : f32
    %153 = vector.broadcast %cst_66 : f32 to vector<2x32xf32>
    %154 = arith.mulf %153, %152 : vector<2x32xf32>
    %155 = vector.extract_strided_slice %144 {offsets = [0, 64], sizes = [2, 32], strides = [1, 1]} : vector<2x128xf32> to vector<2x32xf32>
    %156 = vector.extract_strided_slice %144 {offsets = [0, 96], sizes = [2, 32], strides = [1, 1]} : vector<2x128xf32> to vector<2x32xf32>
    %cst_67 = arith.constant 1.000000e+00 : f32
    %157 = vector.broadcast %cst_67 : f32 to vector<2x32xf32>
    %158 = arith.addf %156, %157 : vector<2x32xf32>
    %cst_68 = arith.constant 5.000000e-01 : f32
    %159 = vector.broadcast %cst_68 : f32 to vector<2x32xf32>
    %160 = arith.mulf %159, %158 : vector<2x32xf32>
    %161 = arith.mulf %154, %133 : vector<2x32xf32>
    %162 = arith.mulf %149, %155 : vector<2x32xf32>
    %163 = arith.addf %161, %162 : vector<2x32xf32>
    %164 = math.tanh %163 : vector<2x32xf32>
    %165 = arith.mulf %160, %164 : vector<2x32xf32>
    %166 = arith.index_cast %139 : i32 to index
    %c0_69 = arith.constant 0 : index
    %167 = vector.load %arg10[%166, %c0_69] : memref<16x32xf32, #tpu.memory_space<vmem>>, vector<2x32xf32>
    tpu.vector_store %arg10[%166, %c0_69], %165 {strides = array<i32>} : memref<16x32xf32, #tpu.memory_space<vmem>>, vector<2x32xf32>,
    %c5_i32 = arith.constant 5 : i32
    %c2_i32_70 = arith.constant 2 : i32
    %168 = arith.muli %c5_i32, %c2_i32_70 : i32
    %169 = tpu.assume_multiple %168, 2 : i32
    %170 = arith.index_cast %169 : i32 to index
    %c0_71 = arith.constant 0 : index
    %171 = vector.load %arg11[%170, %c0_71] : memref<16x128xf32, #tpu.memory_space<vmem>>, vector<2x128xf32>
    %cst_72 = arith.constant dense<0.000000e+00> : vector<2x128xf32>
    %172 = tpu.matmul %165, %13, %cst_72 {dimension_numbers = #tpu.dot_dimension_numbers<[1], [0], [0], [1], [0, 0, 1, 1], [], []>} : vector<2x32xf32>, vector<32x128xf32>, vector<2x128xf32> -> vector<2x128xf32>
    %173 = arith.addf %171, %172 : vector<2x128xf32>
    %174 = math.tanh %173 : vector<2x128xf32>
    %175 = vector.extract_strided_slice %174 {offsets = [0, 0], sizes = [2, 32], strides = [1, 1]} : vector<2x128xf32> to vector<2x32xf32>
    %cst_73 = arith.constant 1.000000e+00 : f32
    %176 = vector.broadcast %cst_73 : f32 to vector<2x32xf32>
    %177 = arith.addf %175, %176 : vector<2x32xf32>
    %cst_74 = arith.constant 5.000000e-01 : f32
    %178 = vector.broadcast %cst_74 : f32 to vector<2x32xf32>
    %179 = arith.mulf %178, %177 : vector<2x32xf32>
    %180 = vector.extract_strided_slice %174 {offsets = [0, 32], sizes = [2, 32], strides = [1, 1]} : vector<2x128xf32> to vector<2x32xf32>
    %cst_75 = arith.constant 1.000000e+00 : f32
    %181 = vector.broadcast %cst_75 : f32 to vector<2x32xf32>
    %182 = arith.addf %180, %181 : vector<2x32xf32>
    %cst_76 = arith.constant 5.000000e-01 : f32
    %183 = vector.broadcast %cst_76 : f32 to vector<2x32xf32>
    %184 = arith.mulf %183, %182 : vector<2x32xf32>
    %185 = vector.extract_strided_slice %174 {offsets = [0, 64], sizes = [2, 32], strides = [1, 1]} : vector<2x128xf32> to vector<2x32xf32>
    %186 = vector.extract_strided_slice %174 {offsets = [0, 96], sizes = [2, 32], strides = [1, 1]} : vector<2x128xf32> to vector<2x32xf32>
    %cst_77 = arith.constant 1.000000e+00 : f32
    %187 = vector.broadcast %cst_77 : f32 to vector<2x32xf32>
    %188 = arith.addf %186, %187 : vector<2x32xf32>
    %cst_78 = arith.constant 5.000000e-01 : f32
    %189 = vector.broadcast %cst_78 : f32 to vector<2x32xf32>
    %190 = arith.mulf %189, %188 : vector<2x32xf32>
    %191 = arith.mulf %184, %163 : vector<2x32xf32>
    %192 = arith.mulf %179, %185 : vector<2x32xf32>
    %193 = arith.addf %191, %192 : vector<2x32xf32>
    %194 = math.tanh %193 : vector<2x32xf32>
    %195 = arith.mulf %190, %194 : vector<2x32xf32>
    %196 = arith.index_cast %169 : i32 to index
    %c0_79 = arith.constant 0 : index
    %197 = vector.load %arg10[%196, %c0_79] : memref<16x32xf32, #tpu.memory_space<vmem>>, vector<2x32xf32>
    tpu.vector_store %arg10[%196, %c0_79], %195 {strides = array<i32>} : memref<16x32xf32, #tpu.memory_space<vmem>>, vector<2x32xf32>,
    %c6_i32 = arith.constant 6 : i32
    %c2_i32_80 = arith.constant 2 : i32
    %198 = arith.muli %c6_i32, %c2_i32_80 : i32
    %199 = tpu.assume_multiple %198, 2 : i32
    %200 = arith.index_cast %199 : i32 to index
    %c0_81 = arith.constant 0 : index
    %201 = vector.load %arg11[%200, %c0_81] : memref<16x128xf32, #tpu.memory_space<vmem>>, vector<2x128xf32>
    %cst_82 = arith.constant dense<0.000000e+00> : vector<2x128xf32>
    %202 = tpu.matmul %195, %13, %cst_82 {dimension_numbers = #tpu.dot_dimension_numbers<[1], [0], [0], [1], [0, 0, 1, 1], [], []>} : vector<2x32xf32>, vector<32x128xf32>, vector<2x128xf32> -> vector<2x128xf32>
    %203 = arith.addf %201, %202 : vector<2x128xf32>
    %204 = math.tanh %203 : vector<2x128xf32>
    %205 = vector.extract_strided_slice %204 {offsets = [0, 0], sizes = [2, 32], strides = [1, 1]} : vector<2x128xf32> to vector<2x32xf32>
    %cst_83 = arith.constant 1.000000e+00 : f32
    %206 = vector.broadcast %cst_83 : f32 to vector<2x32xf32>
    %207 = arith.addf %205, %206 : vector<2x32xf32>
    %cst_84 = arith.constant 5.000000e-01 : f32
    %208 = vector.broadcast %cst_84 : f32 to vector<2x32xf32>
    %209 = arith.mulf %208, %207 : vector<2x32xf32>
    %210 = vector.extract_strided_slice %204 {offsets = [0, 32], sizes = [2, 32], strides = [1, 1]} : vector<2x128xf32> to vector<2x32xf32>
    %cst_85 = arith.constant 1.000000e+00 : f32
    %211 = vector.broadcast %cst_85 : f32 to vector<2x32xf32>
    %212 = arith.addf %210, %211 : vector<2x32xf32>
    %cst_86 = arith.constant 5.000000e-01 : f32
    %213 = vector.broadcast %cst_86 : f32 to vector<2x32xf32>
    %214 = arith.mulf %213, %212 : vector<2x32xf32>
    %215 = vector.extract_strided_slice %204 {offsets = [0, 64], sizes = [2, 32], strides = [1, 1]} : vector<2x128xf32> to vector<2x32xf32>
    %216 = vector.extract_strided_slice %204 {offsets = [0, 96], sizes = [2, 32], strides = [1, 1]} : vector<2x128xf32> to vector<2x32xf32>
    %cst_87 = arith.constant 1.000000e+00 : f32
    %217 = vector.broadcast %cst_87 : f32 to vector<2x32xf32>
    %218 = arith.addf %216, %217 : vector<2x32xf32>
    %cst_88 = arith.constant 5.000000e-01 : f32
    %219 = vector.broadcast %cst_88 : f32 to vector<2x32xf32>
    %220 = arith.mulf %219, %218 : vector<2x32xf32>
    %221 = arith.mulf %214, %193 : vector<2x32xf32>
    %222 = arith.mulf %209, %215 : vector<2x32xf32>
    %223 = arith.addf %221, %222 : vector<2x32xf32>
    %224 = math.tanh %223 : vector<2x32xf32>
    %225 = arith.mulf %220, %224 : vector<2x32xf32>
    %226 = arith.index_cast %199 : i32 to index
    %c0_89 = arith.constant 0 : index
    %227 = vector.load %arg10[%226, %c0_89] : memref<16x32xf32, #tpu.memory_space<vmem>>, vector<2x32xf32>
    tpu.vector_store %arg10[%226, %c0_89], %225 {strides = array<i32>} : memref<16x32xf32, #tpu.memory_space<vmem>>, vector<2x32xf32>,
    %c7_i32 = arith.constant 7 : i32
    %c2_i32_90 = arith.constant 2 : i32
    %228 = arith.muli %c7_i32, %c2_i32_90 : i32
    %229 = tpu.assume_multiple %228, 2 : i32
    %230 = arith.index_cast %229 : i32 to index
    %c0_91 = arith.constant 0 : index
    %231 = vector.load %arg11[%230, %c0_91] : memref<16x128xf32, #tpu.memory_space<vmem>>, vector<2x128xf32>
    %cst_92 = arith.constant dense<0.000000e+00> : vector<2x128xf32>
    %232 = tpu.matmul %225, %13, %cst_92 {dimension_numbers = #tpu.dot_dimension_numbers<[1], [0], [0], [1], [0, 0, 1, 1], [], []>} : vector<2x32xf32>, vector<32x128xf32>, vector<2x128xf32> -> vector<2x128xf32>
    %233 = arith.addf %231, %232 : vector<2x128xf32>
    %234 = math.tanh %233 : vector<2x128xf32>
    %235 = vector.extract_strided_slice %234 {offsets = [0, 0], sizes = [2, 32], strides = [1, 1]} : vector<2x128xf32> to vector<2x32xf32>
    %cst_93 = arith.constant 1.000000e+00 : f32
    %236 = vector.broadcast %cst_93 : f32 to vector<2x32xf32>
    %237 = arith.addf %235, %236 : vector<2x32xf32>
    %cst_94 = arith.constant 5.000000e-01 : f32
    %238 = vector.broadcast %cst_94 : f32 to vector<2x32xf32>
    %239 = arith.mulf %238, %237 : vector<2x32xf32>
    %240 = vector.extract_strided_slice %234 {offsets = [0, 32], sizes = [2, 32], strides = [1, 1]} : vector<2x128xf32> to vector<2x32xf32>
    %cst_95 = arith.constant 1.000000e+00 : f32
    %241 = vector.broadcast %cst_95 : f32 to vector<2x32xf32>
    %242 = arith.addf %240, %241 : vector<2x32xf32>
    %cst_96 = arith.constant 5.000000e-01 : f32
    %243 = vector.broadcast %cst_96 : f32 to vector<2x32xf32>
    %244 = arith.mulf %243, %242 : vector<2x32xf32>
    %245 = vector.extract_strided_slice %234 {offsets = [0, 64], sizes = [2, 32], strides = [1, 1]} : vector<2x128xf32> to vector<2x32xf32>
    %246 = vector.extract_strided_slice %234 {offsets = [0, 96], sizes = [2, 32], strides = [1, 1]} : vector<2x128xf32> to vector<2x32xf32>
    %cst_97 = arith.constant 1.000000e+00 : f32
    %247 = vector.broadcast %cst_97 : f32 to vector<2x32xf32>
    %248 = arith.addf %246, %247 : vector<2x32xf32>
    %cst_98 = arith.constant 5.000000e-01 : f32
    %249 = vector.broadcast %cst_98 : f32 to vector<2x32xf32>
    %250 = arith.mulf %249, %248 : vector<2x32xf32>
    %251 = arith.mulf %244, %223 : vector<2x32xf32>
    %252 = arith.mulf %239, %245 : vector<2x32xf32>
    %253 = arith.addf %251, %252 : vector<2x32xf32>
    %254 = math.tanh %253 : vector<2x32xf32>
    %255 = arith.mulf %250, %254 : vector<2x32xf32>
    %256 = arith.index_cast %229 : i32 to index
    %c0_99 = arith.constant 0 : index
    %257 = vector.load %arg10[%256, %c0_99] : memref<16x32xf32, #tpu.memory_space<vmem>>, vector<2x32xf32>
    tpu.vector_store %arg10[%256, %c0_99], %255 {strides = array<i32>} : memref<16x32xf32, #tpu.memory_space<vmem>>, vector<2x32xf32>,
    %c8_i32 = arith.constant 8 : i32
    %c0_100 = arith.constant 0 : index
    %c0_101 = arith.constant 0 : index
    %c0_102 = arith.constant 0 : index
    %258 = vector.load %arg8[%c0_100, %c0_101, %c0_102] : memref<1x2x32xf32, #tpu.memory_space<vmem>>, vector<1x2x32xf32>
    %259 = vector.shape_cast %258 : vector<1x2x32xf32> to vector<2x32xf32>
    %260 = vector.shape_cast %255 : vector<2x32xf32> to vector<1x2x32xf32>
    tpu.vector_store %arg8[%c0_100, %c0_101, %c0_102], %260 {strides = array<i32>} : memref<1x2x32xf32, #tpu.memory_space<vmem>>, vector<1x2x32xf32>,
    %c0_103 = arith.constant 0 : index
    %c0_104 = arith.constant 0 : index
    %c0_105 = arith.constant 0 : index
    %261 = vector.load %arg9[%c0_103, %c0_104, %c0_105] : memref<1x2x32xf32, #tpu.memory_space<vmem>>, vector<1x2x32xf32>
    %262 = vector.shape_cast %261 : vector<1x2x32xf32> to vector<2x32xf32>
    %263 = vector.shape_cast %253 : vector<2x32xf32> to vector<1x2x32xf32>
    tpu.vector_store %arg9[%c0_103, %c0_104, %c0_105], %263 {strides = array<i32>} : memref<1x2x32xf32, #tpu.memory_space<vmem>>, vector<1x2x32xf32>,
    %c1_i32_106 = arith.constant 1 : i32
    %264 = arith.cmpi eq, %arg0, %c1_i32_106 : i32
    %265 = arith.extui %264 : i1 to i32
    %c0_i32_107 = arith.constant 0 : i32
    %266 = arith.cmpi ne, %265, %c0_i32_107 : i32
    scf.if %266 {
      %c0_108 = arith.constant 0 : index
      %c0_109 = arith.constant 0 : index
      %267 = vector.load %arg10[%c0_108, %c0_109] : memref<16x32xf32, #tpu.memory_space<vmem>>, vector<16x32xf32>
      %c0_110 = arith.constant 0 : index
      %c0_111 = arith.constant 0 : index
      %268 = vector.load %arg7[%c0_110, %c0_111] : memref<16x32xf32, #tpu.memory_space<vmem>>, vector<16x32xf32>
      tpu.vector_store %arg7[%c0_110, %c0_111], %267 {strides = array<i32>} : memref<16x32xf32, #tpu.memory_space<vmem>>, vector<16x32xf32>,
    } else {
    }
    return
  }
  func.func @transform_0(%arg0: i32) -> (i32, i32) {
    %c0_i32 = arith.constant 0 : i32
    %c0_i32_0 = arith.constant 0 : i32
    %c0_i32_1 = arith.constant 0 : i32
    return %c0_i32, %c0_i32_0 : i32, i32
  }
  func.func @transform_1(%arg0: i32) -> (i32, i32, i32) {
    %c0_i32 = arith.constant 0 : i32
    %c0_i32_0 = arith.constant 0 : i32
    %c0_i32_1 = arith.constant 0 : i32
    return %arg0, %c0_i32, %c0_i32_0 : i32, i32, i32
  }
  func.func @transform_2(%arg0: i32) -> (i32, i32, i32) {
    %c0_i32 = arith.constant 0 : i32
    %c0_i32_0 = arith.constant 0 : i32
    %c0_i32_1 = arith.constant 0 : i32
    return %arg0, %c0_i32, %c0_i32_0 : i32, i32, i32
  }
  func.func @transform_3(%arg0: i32) -> (i32, i32, i32) {
    %c0_i32 = arith.constant 0 : i32
    %c0_i32_0 = arith.constant 0 : i32
    %c0_i32_1 = arith.constant 0 : i32
    return %arg0, %c0_i32, %c0_i32_0 : i32, i32, i32
  }
  func.func @transform_4(%arg0: i32) -> (i32, i32, i32) {
    %c0_i32 = arith.constant 0 : i32
    %c0_i32_0 = arith.constant 0 : i32
    %c0_i32_1 = arith.constant 0 : i32
    return %arg0, %c0_i32, %c0_i32_0 : i32, i32, i32
  }
  func.func @transform_5(%arg0: i32) -> (i32, i32, i32) {
    %c0_i32 = arith.constant 0 : i32
    %c0_i32_0 = arith.constant 0 : i32
    %c0_i32_1 = arith.constant 0 : i32
    return %arg0, %c0_i32, %c0_i32_0 : i32, i32, i32
  }
  func.func @transform_6(%arg0: i32) -> (i32, i32) {
    %c0_i32 = arith.constant 0 : i32
    %c0_i32_0 = arith.constant 0 : i32
    %c0_i32_1 = arith.constant 0 : i32
    return %c0_i32, %c0_i32_0 : i32, i32
  }
  func.func @transform_7(%arg0: i32) -> (i32, i32, i32) {
    %c0_i32 = arith.constant 0 : i32
    %c0_i32_0 = arith.constant 0 : i32
    %c0_i32_1 = arith.constant 0 : i32
    return %arg0, %c0_i32, %c0_i32_0 : i32, i32, i32
  }
  func.func @transform_8(%arg0: i32) -> (i32, i32, i32) {
    %c0_i32 = arith.constant 0 : i32
    %c0_i32_0 = arith.constant 0 : i32
    %c0_i32_1 = arith.constant 0 : i32
    return %arg0, %c0_i32, %c0_i32_0 : i32, i32, i32
  }
}

</mosaic_0001>

<llo_original>
// kernel: _lstm_forward.1
$region0: #{_lstm_forward.1}
  #allocation0 [shape = 'u32[]', space=smem, size = 0x4, offset = 0x4, fixed_abs, tag = 'smem constant byte address 0x4 - core index']
  #allocation1 [shape = 'u32[144,128]{1,0:T(1,128)}', space=vmem, size = 0x12000, scoped, tag = 'internal scratch']
  #allocation2 [shape = 'f32[16,32]{1,0:T(8,128)}', space=vmem, size = 0x2000, scoped, tag = 'scratch operand']
  #allocation3 [shape = 'f32[16,128]{1,0:T(8,128)}', space=vmem, size = 0x2000, scoped, tag = 'scratch operand']
  %s0 = inlined_call_operand.vmem [shape: f32[16,32], index: 0, kind: input, shape index: {}]
  %s1 = inlined_call_operand.vmem [shape: f32[2,2,32], index: 1, kind: input, shape index: {}]
  %s2 = inlined_call_operand.vmem [shape: f32[2,2,32], index: 2, kind: input, shape index: {}]
  %s3 = inlined_call_operand.vmem [shape: f32[2,32,128], index: 3, kind: input, shape index: {}]
  %s4 = inlined_call_operand.hbm [shape: f32[2,32,128], index: 4, kind: input, shape index: {}]
  %s5 = inlined_call_operand.vmem [shape: f32[2,1,128], index: 5, kind: input, shape index: {}]
  %s6 = inlined_call_operand.vmem [shape: f32[16,32], index: 6, kind: output, shape index: {0}]
  %s7 = inlined_call_operand.hbm [shape: f32[2,2,32], index: 7, kind: output, shape index: {1}]
  %s8 = inlined_call_operand.hbm [shape: f32[2,2,32], index: 8, kind: output, shape index: {2}]
  %9 = xla_tuple %s6, %s7, %s8
  %s10 = sld [smem:[#allocation0]]
  $region85: #{_lstm_forward.1} parent=0
    _
  %s12 = ssub.s32 1, %s10
  %s13 = scalar_select 0, %s12, %s10
  $region1: #{_lstm_forward.1} parent=0
    #allocation4 [shape = 'u8[32768]{0}', space=vmem, size = 0x8000, scoped, tag = 'input window, operand 4']
    #allocation5 [shape = 's32[2]{0}', space=sflag, size = 0x8, scoped, tag = 'scoped memory for _lstm_forward.1']
    #allocation6 [shape = 's32[2]{0}', space=sflag, size = 0x8, scoped, tag = 'scoped memory for _lstm_forward.1']
    #allocation7 [shape = 'u8[2048]{0}', space=vmem, size = 0x800, scoped, tag = 'output window, operand 1']
    #allocation8 [shape = 'u8[2048]{0}', space=vmem, size = 0x800, scoped, tag = 'output window, operand 2']
    #allocation9 [shape = 's32[2]{0}', space=sflag, size = 0x8, scoped, tag = 'scoped memory for _lstm_forward.1']
    %14 = vsyncpa [#allocation5], 0
    %s15 = scalar_lea.sflag [#allocation5], 1
    %16 = vsyncpa %s15, 0
    %17 = vsyncpa [#allocation6], 0
    %s18 = scalar_lea.sflag [#allocation6], 1
    %19 = vsyncpa %s18, 0
    %20 = vsyncpa [#allocation9], 0
    %s21 = scalar_lea.sflag [#allocation9], 1
    %22 = vsyncpa %s21, 0
    loop: start=0, step=1, limit=4
    $region2: #{_lstm_forward.1} parent=1 // loop_pre_header
      _
    $region3: #{_lstm_forward.1} parent=1 // loop_header
      %s24 = sphi 0, %s28
      %p25 = scmp.ge.s32.totalorder %s24, 4
      %s32 = sphi 0, %s32
      %s34 = sphi 0, %s32
      %s35 = sphi 0, %s34
      %s49 = sphi 0, %s35
      %s55 = sphi 0, %s57
      %s58 = sphi 0, %s55
      %s59 = sphi 0, %s58
      %s75 = sphi 0, %s59
      %s81 = sphi 0, %s83
      %s84 = sphi 0, %s81
      %s85 = sphi 0, %s84
      %s101 = sphi 0, %s85
      %s107 = sphi 0, %s109
      %s110 = sphi 0, %s107
      %s111 = sphi 0, %s110
      %s127 = sphi 0, %s111
      %s133 = sphi 0, %s135
      %s136 = sphi 0, %s133
      %s137 = sphi 0, %s136
      %s153 = sphi 0, %s137
      %s159 = sphi 0, %s161
      %s162 = sphi 0, %s159
      %s163 = sphi 0, %s162
      %s179 = sphi 0, %s163
      %s183 = sphi 0, %s183
      %s185 = sphi 0, %s183
      %s186 = sphi 0, %s185
      %s200 = sphi 0, %s186
      %s206 = sphi 0, %s208
      %s209 = sphi 0, %s206
      %s210 = sphi 0, %s209
      %s226 = sphi 0, %s210
      %s232 = sphi 0, %s234
      %s235 = sphi 0, %s232
      %s236 = sphi 0, %s235
      %s252 = sphi 0, %s236
    $region4: #{_lstm_forward.1} parent=1 // loop_header_branch
      %27 = sbr.rel (%p25) target = $region8
    $region5: #{_lstm_forward.1} parent=1 // loop_body
      %s29 = ssub.s32 %s24, 1
      %s30 = ssub.s32 %s24, 2
      %s31 = sadd.s32 %s24, 1
      %s33 = sadd.s32 %s32, 1
      %p36 = scmp.eq.s32.totalorder %s24, 1
      %p37 = scmp.ne.s32.totalorder %s32, %s34
      %p38 = scmp.eq.s32.totalorder %s24, 0
      %p39 = por %p37, %p38
      %p40 = scmp.ne.s32.totalorder %s32, %s34
      %p41 = scmp.eq.s32.totalorder %s29, 1
      %p42 = por %p40, %p41
      %p43 = scmp.ne.s32.totalorder %s34, %s35
      %p44 = scmp.eq.s32.totalorder %s29, 0
      %p45 = por %p43, %p44
      %p46 = scmp.ne.s32.totalorder %s34, %s35
      %p47 = scmp.eq.s32.totalorder %s30, 1
      %p48 = por %p46, %p47
      %p50 = scmp.ne.s32.totalorder %s35, %s49
      %p51 = scmp.eq.s32.totalorder %s30, 0
      %p52 = por %p50, %p51
      %s53 = ssub.s32 %s24, %s31
      %p54 = scmp.eq.s32.totalorder %s53, 0
      %s56 = sadd.s32 %s55, 1
      %s57 = scalar_select %p54, %s55, %s56
      %p60 = pneg %p54
      %p61 = scmp.eq.s32.totalorder %s24, 1
      %p62 = por %p60, %p61
      %p63 = scmp.ne.s32.totalorder %s55, %s58
      %p64 = scmp.eq.s32.totalorder %s24, 0
      %p65 = por %p63, %p64
      %p66 = scmp.ne.s32.totalorder %s55, %s58
      %p67 = scmp.eq.s32.totalorder %s29, 1
      %p68 = por %p66, %p67
      %p69 = scmp.ne.s32.totalorder %s58, %s59
      %p70 = scmp.eq.s32.totalorder %s29, 0
      %p71 = por %p69, %p70
      %p72 = scmp.ne.s32.totalorder %s58, %s59
      %p73 = scmp.eq.s32.totalorder %s30, 1
      %p74 = por %p72, %p73
      %p76 = scmp.ne.s32.totalorder %s59, %s75
      %p77 = scmp.eq.s32.totalorder %s30, 0
      %p78 = por %p76, %p77
      %s79 = ssub.s32 %s24, %s31
      %p80 = scmp.eq.s32.totalorder %s79, 0
      %s82 = sadd.s32 %s81, 1
      %s83 = scalar_select %p80, %s81, %s82
      %p86 = pneg %p80
      %p87 = scmp.eq.s32.totalorder %s24, 1
      %p88 = por %p86, %p87
      %p89 = scmp.ne.s32.totalorder %s81, %s84
      %p90 = scmp.eq.s32.totalorder %s24, 0
      %p91 = por %p89, %p90
      %p92 = scmp.ne.s32.totalorder %s81, %s84
      %p93 = scmp.eq.s32.totalorder %s29, 1
      %p94 = por %p92, %p93
      %p95 = scmp.ne.s32.totalorder %s84, %s85
      %p96 = scmp.eq.s32.totalorder %s29, 0
      %p97 = por %p95, %p96
      %p98 = scmp.ne.s32.totalorder %s84, %s85
      %p99 = scmp.eq.s32.totalorder %s30, 1
      %p100 = por %p98, %p99
      %p102 = scmp.ne.s32.totalorder %s85, %s101
      %p103 = scmp.eq.s32.totalorder %s30, 0
      %p104 = por %p102, %p103
      %s105 = ssub.s32 %s24, %s31
      %p106 = scmp.eq.s32.totalorder %s105, 0
      %s108 = sadd.s32 %s107, 1
      %s109 = scalar_select %p106, %s107, %s108
      %p112 = pneg %p106
      %p113 = scmp.eq.s32.totalorder %s24, 1
      %p114 = por %p112, %p113
      %p115 = scmp.ne.s32.totalorder %s107, %s110
      %p116 = scmp.eq.s32.totalorder %s24, 0
      %p117 = por %p115, %p116
      %p118 = scmp.ne.s32.totalorder %s107, %s110
      %p119 = scmp.eq.s32.totalorder %s29, 1
      %p120 = por %p118, %p119
      %p121 = scmp.ne.s32.totalorder %s110, %s111
      %p122 = scmp.eq.s32.totalorder %s29, 0
      %p123 = por %p121, %p122
      %p124 = scmp.ne.s32.totalorder %s110, %s111
      %p125 = scmp.eq.s32.totalorder %s30, 1
      %p126 = por %p124, %p125
      %p128 = scmp.ne.s32.totalorder %s111, %s127
      %p129 = scmp.eq.s32.totalorder %s30, 0
      %p130 = por %p128, %p129
      %s131 = ssub.s32 %s24, %s31
      %p132 = scmp.eq.s32.totalorder %s131, 0
      %s134 = sadd.s32 %s133, 1
      %s135 = scalar_select %p132, %s133, %s134
      %p138 = pneg %p132
      %p139 = scmp.eq.s32.totalorder %s24, 1
      %p140 = por %p138, %p139
      %p141 = scmp.ne.s32.totalorder %s133, %s136
      %p142 = scmp.eq.s32.totalorder %s24, 0
      %p143 = por %p141, %p142
      %p144 = scmp.ne.s32.totalorder %s133, %s136
      %p145 = scmp.eq.s32.totalorder %s29, 1
      %p146 = por %p144, %p145
      %p147 = scmp.ne.s32.totalorder %s136, %s137
      %p148 = scmp.eq.s32.totalorder %s29, 0
      %p149 = por %p147, %p148
      %p150 = scmp.ne.s32.totalorder %s136, %s137
      %p151 = scmp.eq.s32.totalorder %s30, 1
      %p152 = por %p150, %p151
      %p154 = scmp.ne.s32.totalorder %s137, %s153
      %p155 = scmp.eq.s32.totalorder %s30, 0
      %p156 = por %p154, %p155
      %s157 = ssub.s32 %s24, %s31
      %p158 = scmp.eq.s32.totalorder %s157, 0
      %s160 = sadd.s32 %s159, 1
      %s161 = scalar_select %p158, %s159, %s160
      %p164 = pneg %p158
      %p165 = scmp.eq.s32.totalorder %s24, 1
      %p166 = por %p164, %p165
      %p167 = scmp.ne.s32.totalorder %s159, %s162
      %p168 = scmp.eq.s32.totalorder %s24, 0
      %p169 = por %p167, %p168
      %p170 = scmp.ne.s32.totalorder %s159, %s162
      %p171 = scmp.eq.s32.totalorder %s29, 1
      %p172 = por %p170, %p171
      %p173 = scmp.ne.s32.totalorder %s162, %s163
      %p174 = scmp.eq.s32.totalorder %s29, 0
      %p175 = por %p173, %p174
      %p176 = scmp.ne.s32.totalorder %s162, %s163
      %p177 = scmp.eq.s32.totalorder %s30, 1
      %p178 = por %p176, %p177
      %p180 = scmp.ne.s32.totalorder %s163, %s179
      %p181 = scmp.eq.s32.totalorder %s30, 0
      %p182 = por %p180, %p181
      %s184 = sadd.s32 %s183, 1
      %p187 = scmp.eq.s32.totalorder %s24, 1
      %p188 = scmp.ne.s32.totalorder %s183, %s185
      %p189 = scmp.eq.s32.totalorder %s24, 0
      %p190 = por %p188, %p189
      %p191 = scmp.ne.s32.totalorder %s183, %s185
      %p192 = scmp.eq.s32.totalorder %s29, 1
      %p193 = por %p191, %p192
      %p194 = scmp.ne.s32.totalorder %s185, %s186
      %p195 = scmp.eq.s32.totalorder %s29, 0
      %p196 = por %p194, %p195
      %p197 = scmp.ne.s32.totalorder %s185, %s186
      %p198 = scmp.eq.s32.totalorder %s30, 1
      %p199 = por %p197, %p198
      %p201 = scmp.ne.s32.totalorder %s186, %s200
      %p202 = scmp.eq.s32.totalorder %s30, 0
      %p203 = por %p201, %p202
      %s204 = ssub.s32 %s24, %s31
      %p205 = scmp.eq.s32.totalorder %s204, 0
      %s207 = sadd.s32 %s206, 1
      %s208 = scalar_select %p205, %s206, %s207
      %p211 = pneg %p205
      %p212 = scmp.eq.s32.totalorder %s24, 1
      %p213 = por %p211, %p212
      %p214 = scmp.ne.s32.totalorder %s206, %s209
      %p215 = scmp.eq.s32.totalorder %s24, 0
      %p216 = por %p214, %p215
      %p217 = scmp.ne.s32.totalorder %s206, %s209
      %p218 = scmp.eq.s32.totalorder %s29, 1
      %p219 = por %p217, %p218
      %p220 = scmp.ne.s32.totalorder %s209, %s210
      %p221 = scmp.eq.s32.totalorder %s29, 0
      %p222 = por %p220, %p221
      %p223 = scmp.ne.s32.totalorder %s209, %s210
      %p224 = scmp.eq.s32.totalorder %s30, 1
      %p225 = por %p223, %p224
      %p227 = scmp.ne.s32.totalorder %s210, %s226
      %p228 = scmp.eq.s32.totalorder %s30, 0
      %p229 = por %p227, %p228
      %s230 = ssub.s32 %s24, %s31
      %p231 = scmp.eq.s32.totalorder %s230, 0
      %s233 = sadd.s32 %s232, 1
      %s234 = scalar_select %p231, %s232, %s233
      %p237 = pneg %p231
      %p238 = scmp.eq.s32.totalorder %s24, 1
      %p239 = por %p237, %p238
      %p240 = scmp.ne.s32.totalorder %s232, %s235
      %p241 = scmp.eq.s32.totalorder %s24, 0
      %p242 = por %p240, %p241
      %p243 = scmp.ne.s32.totalorder %s232, %s235
      %p244 = scmp.eq.s32.totalorder %s29, 1
      %p245 = por %p243, %p244
      %p246 = scmp.ne.s32.totalorder %s235, %s236
      %p247 = scmp.eq.s32.totalorder %s29, 0
      %p248 = por %p246, %p247
      %p249 = scmp.ne.s32.totalorder %s235, %s236
      %p250 = scmp.eq.s32.totalorder %s30, 1
      %p251 = por %p249, %p250
      %p253 = scmp.ne.s32.totalorder %s236, %s252
      %p254 = scmp.eq.s32.totalorder %s30, 0
      %p255 = por %p253, %p254
      %p256 = scmp.le.s32.totalorder 1, %s24
      %p257 = scmp.lt.s32.totalorder %s24, 3
      %p258 = pnand %p256, %p257
      %p259 = pneg %p258
      // Predicated region
      $region9: #{_lstm_forward.1} parent=5 // pred_check
        _
      $region10: #{_lstm_forward.1} parent=5 // pred_check_branch
        %261 = sbr.rel (%p258) target = $region12
      $region11: #{_lstm_forward.1} parent=5 // pred_region
        %s262 = ssub.s32 %s24, 1
        // Predicated region
        $region13: #{_lstm_forward.1} parent=11 // pred_check
          %p263 = pneg %p45
        $region14: #{_lstm_forward.1} parent=11 // pred_check_branch
          %265 = sbr.rel (%p263) target = $region16
        $region15: #{_lstm_forward.1} parent=11 // pred_region
          _
        $region16: #{_lstm_forward.1} parent=11 // pred_fallthru
          _
      $region12: #{_lstm_forward.1} parent=5 // pred_fallthru
        _
      %p266 = scmp.lt.s32.totalorder %s24, 2
      // Predicated region
      $region17: #{_lstm_forward.1} parent=5 // pred_check
        %p267 = pneg %p266
      $region18: #{_lstm_forward.1} parent=5 // pred_check_branch
        %269 = sbr.rel (%p267) target = $region20
      $region19: #{_lstm_forward.1} parent=5 // pred_region
        // Predicated region
        $region21: #{_lstm_forward.1} parent=19 // pred_check
          %p270 = pneg %p65
        $region22: #{_lstm_forward.1} parent=19 // pred_check_branch
          %272 = sbr.rel (%p270) target = $region24
        $region23: #{_lstm_forward.1} parent=19 // pred_region
          %p273 = scmp.lt.s32.totalorder %s24, 1
          %s274 = scalar_select %p273, %s24, 1
          %s275 = smul.addr %s274, 2
          %s276 = scalar_lea.vmem %s1, %s275
        $region24: #{_lstm_forward.1} parent=19 // pred_fallthru
          _
        // Predicated region
        $region25: #{_lstm_forward.1} parent=19 // pred_check
          %p277 = pneg %p91
        $region26: #{_lstm_forward.1} parent=19 // pred_check_branch
          %279 = sbr.rel (%p277) target = $region28
        $region27: #{_lstm_forward.1} parent=19 // pred_region
          %p280 = scmp.lt.s32.totalorder %s24, 1
          %s281 = scalar_select %p280, %s24, 1
          %s282 = smul.addr %s281, 2
          %s283 = scalar_lea.vmem %s2, %s282
        $region28: #{_lstm_forward.1} parent=19 // pred_fallthru
          _
        // Predicated region
        $region29: #{_lstm_forward.1} parent=19 // pred_check
          %p284 = pneg %p117
        $region30: #{_lstm_forward.1} parent=19 // pred_check_branch
          %286 = sbr.rel (%p284) target = $region32
        $region31: #{_lstm_forward.1} parent=19 // pred_region
          %p287 = scmp.lt.s32.totalorder %s24, 1
          %s288 = scalar_select %p287, %s24, 1
          %s289 = smul.addr %s288, 4
          %s290 = smul.addr %s289, 8
          %s291 = scalar_lea.vmem %s3, %s290
        $region32: #{_lstm_forward.1} parent=19 // pred_fallthru
          _
        // Predicated region
        $region33: #{_lstm_forward.1} parent=19 // pred_check
          %p292 = pneg %p143
        $region34: #{_lstm_forward.1} parent=19 // pred_check_branch
          %294 = sbr.rel (%p292) target = $region36
        $region35: #{_lstm_forward.1} parent=19 // pred_region
          %s295 = sand.u32 %s133, 1
          %s296 = scalar_lea.sflag [#allocation5], %s295
          %s297 = sand.u32 %s133, 1
          %s298 = smul.addr %s297, 32
          %s299 = scalar_lea.vmem [#allocation4], %s298
          %s301 = ssub.s32 512, 512
          %302 = vsyncadd %s296, %s301
          %s303 = smul.addr %s24, 4
          %s304 = smul.addr %s303, 128
          %s305 = scalar_lea.hbm %s4, %s304
          %s306 = sshll.u32 %s299, 4
          %s307 = int_to_ptr.vmem [resolvable:$true] %s306
          %312 = dma.hbm_to_vmem [thread:$0]  %s305, 512, %s307, %s296, 128, 128, 8
        $region36: #{_lstm_forward.1} parent=19 // pred_fallthru
          _
        // Predicated region
        $region37: #{_lstm_forward.1} parent=19 // pred_check
          %p313 = pneg %p169
        $region38: #{_lstm_forward.1} parent=19 // pred_check_branch
          %315 = sbr.rel (%p313) target = $region40
        $region39: #{_lstm_forward.1} parent=19 // pred_region
          %p316 = scmp.lt.s32.totalorder %s24, 1
          %s317 = scalar_select %p316, %s24, 1
          %s318 = scalar_lea.vmem %s5, %s317
        $region40: #{_lstm_forward.1} parent=19 // pred_fallthru
          _
      $region20: #{_lstm_forward.1} parent=5 // pred_fallthru
        _
      %p319 = scmp.le.s32.totalorder 1, %s24
      %p320 = scmp.lt.s32.totalorder %s24, 3
      %p321 = pnand %p319, %p320
      %p322 = pneg %p321
      // Predicated region
      $region41: #{_lstm_forward.1} parent=5 // pred_check
        _
      $region42: #{_lstm_forward.1} parent=5 // pred_check_branch
        %324 = sbr.rel (%p321) target = $region44
      $region43: #{_lstm_forward.1} parent=5 // pred_region
        %s325 = ssub.s32 %s24, 1
        %s326 = sand.u32 %s136, 1
        %s327 = scalar_lea.sflag [#allocation5], %s326
        %s328 = sand.u32 %s136, 1
        %s329 = smul.addr %s328, 32
        %s330 = scalar_lea.vmem [#allocation4], %s329
        // Predicated region
        $region45: #{_lstm_forward.1} parent=43 // pred_check
          %p331 = pneg %p149
        $region46: #{_lstm_forward.1} parent=43 // pred_check_branch
          %333 = sbr.rel (%p331) target = $region48
        $region47: #{_lstm_forward.1} parent=43 // pred_region
          %334 = dma.done %s327, 512
        $region48: #{_lstm_forward.1} parent=43 // pred_fallthru
          _
        %p335 = pneg %p45
        %p336 = pneg %p42
        %p337 = scmp.lt.s32.totalorder %s29, 1
        %s338 = scalar_select %p337, %s29, 1
        %s339 = smul.addr %s338, 2
        %s340 = scalar_lea.vmem %s1, %s339
        %p341 = pneg %p71
        %p342 = pneg %p68
        %p343 = scmp.lt.s32.totalorder %s29, 1
        %s344 = scalar_select %p343, %s29, 1
        %s345 = smul.addr %s344, 2
        %s346 = scalar_lea.vmem %s2, %s345
        %p347 = pneg %p97
        %p348 = pneg %p94
        %p349 = scmp.lt.s32.totalorder %s29, 1
        %s350 = scalar_select %p349, %s29, 1
        %s351 = smul.addr %s350, 4
        %s352 = smul.addr %s351, 8
        %s353 = scalar_lea.vmem %s3, %s352
        %p354 = pneg %p123
        %p355 = pneg %p120
        %s356 = sand.u32 %s136, 1
        %s357 = scalar_lea.sflag [#allocation5], %s356
        %s358 = sand.u32 %s136, 1
        %s359 = smul.addr %s358, 32
        %s360 = scalar_lea.vmem [#allocation4], %s359
        %p361 = pneg %p149
        %p362 = pneg %p146
        %p363 = scmp.lt.s32.totalorder %s29, 1
        %s364 = scalar_select %p363, %s29, 1
        %s365 = scalar_lea.vmem %s5, %s364
        %p366 = pneg %p175
        %p367 = pneg %p172
        %p368 = pneg %p196
        %p369 = pneg %p193
        %p370 = pneg %p222
        %p371 = pneg %p219
        %s372 = sand.u32 %s209, 1
        %s373 = scalar_lea.sflag [#allocation6], %s372
        %s374 = sand.u32 %s209, 1
        %s375 = smul.addr %s374, 2
        %s376 = scalar_lea.vmem [#allocation7], %s375
        %p377 = pneg %p248
        %p378 = pneg %p245
        %s379 = sand.u32 %s235, 1
        %s380 = scalar_lea.sflag [#allocation9], %s379
        %s381 = sand.u32 %s235, 1
        %s382 = smul.addr %s381, 2
        %s383 = scalar_lea.vmem [#allocation8], %s382
        %p384 = scmp.lt.s32.totalorder %s29, 1
        %s385 = scalar_select %p384, %s29, 1
        %s386 = smul.addr %s385, 2
        %s387 = scalar_lea.vmem %s1, %s386
        %p388 = scmp.lt.s32.totalorder %s29, 1
        %s389 = scalar_select %p388, %s29, 1
        %s390 = smul.addr %s389, 2
        %s391 = scalar_lea.vmem %s2, %s390
        %p392 = scmp.lt.s32.totalorder %s29, 1
        %s393 = scalar_select %p392, %s29, 1
        %s394 = smul.addr %s393, 4
        %s395 = smul.addr %s394, 8
        %s396 = scalar_lea.vmem %s3, %s395
        %p397 = scmp.lt.s32.totalorder %s29, 1
        %s398 = scalar_select %p397, %s29, 1
        %s399 = scalar_lea.vmem %s5, %s398
        %p400 = scmp.eq.s32.totalorder %s29, 0
        // Predicated region
        $region49: #{_lstm_forward.1} parent=43 // pred_check
          %p401 = pneg %p400
        $region50: #{_lstm_forward.1} parent=43 // pred_check_branch
          %403 = sbr.rel (%p401) target = $region52
        $region51: #{_lstm_forward.1} parent=43 // pred_region
          %v404 = vld [vmem:[%s0] sm:$0xff]
          %v405 = vld [vmem:[%s0 + $0x8] sm:$0xff]
          %vm406 = vcmask 261120
          %407 = vst.msk [vmem:[#allocation2] sm:$0xff] %vm406, %v404
          %408 = vst.msk [vmem:[#allocation2 + $0x8] sm:$0xff] %vm406, %v405
        $region52: #{_lstm_forward.1} parent=43 // pred_fallthru
          _
        %v409 = vld [vmem:[#allocation2] sm:$0xff]
        %v410 = vld [vmem:[#allocation2 + $0x8] sm:$0xff]
        %v411 = vld [vmem:[%s396] sm:$0xff]
        %v412 = vld [vmem:[%s396 + $0x8] sm:$0xff]
        %v413 = vld [vmem:[%s396 + $0x10] sm:$0xff]
        %v414 = vld [vmem:[%s396 + $0x18] sm:$0xff]
        %v415 = vld [vmem:[%s399] sm:$0x1]
        %v417 = vlaneseq
        %v418 = vshrl.u32 %v417, 7
        %v419 = vsub.s32 0, %v418
        %v420 = vrot.slane %v415, %v419
        %vm422 = vcmask 261120
        %v424 = vsel %vm422, %v409, 0
        %v427 = vsel %vm422, %v410, 0
        %429 = vmatprep.subr.mxu0 0.0
        %430 = vmatpush1.msra.mxu0 %v411
        %431 = vmatprep.subr.mxu0 0.0
        %432 = vmatpush1.msra.mxu0 %v412
        %433 = vmatprep.subr.mxu0 0.0
        %434 = vmatpush1.msra.mxu0 %v413
        %435 = vmatprep.subr.mxu0 0.0
        %436 = vmatpush1.msra.mxu0 %v414
        %437 = vmatprep.subr.mxu0 0.0
        %438 = vmatpush1.msra.mxu0 0.0
        %439 = vmatprep.subr.mxu0 0.0
        %440 = vmatpush1.msra.mxu0 0.0
        %441 = vmatprep.subr.mxu0 0.0
        %442 = vmatpush1.msra.mxu0 0.0
        %443 = vmatprep.subr.mxu0 0.0
        %444 = vmatpush1.msra.mxu0 0.0
        %445 = vmatprep.subr.mxu0 0.0
        %446 = vmatpush1.msra.mxu0 0.0
        %447 = vmatprep.subr.mxu0 0.0
        %448 = vmatpush1.msra.mxu0 0.0
        %449 = vmatprep.subr.mxu0 0.0
        %450 = vmatpush1.msra.mxu0 0.0
        %451 = vmatprep.subr.mxu0 0.0
        %452 = vmatpush1.msra.mxu0 0.0
        %453 = vmatprep.subr.mxu0 0.0
        %454 = vmatpush1.msra.mxu0 0.0
        %455 = vmatprep.subr.mxu0 0.0
        %456 = vmatpush1.msra.mxu0 0.0
        %457 = vmatprep.subr.mxu0 0.0
        %458 = vmatpush1.msra.mxu0 0.0
        %459 = vmatprep.subr.mxu0 0.0
        %460 = vmatpush1.msra.mxu0 0.0
        %461 = vmatprep.subr.mxu0 0.0
        %462 = vmatpush1.msra.mxu0 0.0
        %463 = vmatprep.subr.mxu0 0.0
        %464 = vmatpush1.msra.mxu0 0.0
        %465 = vmatprep.subr.mxu0 0.0
        %466 = vmatpush1.msra.mxu0 0.0
        %467 = vmatprep.subr.mxu0 0.0
        %468 = vmatpush1.msra.mxu0 0.0
        %469 = vmatprep.subr.mxu0 0.0
        %470 = vmatpush1.msra.mxu0 0.0
        %471 = vmatprep.subr.mxu0 0.0
        %472 = vmatpush1.msra.mxu0 0.0
        %473 = vmatprep.subr.mxu0 0.0
        %474 = vmatpush1.msra.mxu0 0.0
        %475 = vmatprep.subr.mxu0 0.0
        %476 = vmatpush1.msra.mxu0 0.0
        %477 = vmatprep.subr.mxu0 0.0
        %478 = vmatpush1.msra.mxu0 0.0
        %479 = vmatprep.subr.mxu0 0.0
        %480 = vmatpush1.msra.mxu0 0.0
        %481 = vmatprep.subr.mxu0 0.0
        %482 = vmatpush1.msra.mxu0 0.0
        %483 = vmatprep.subr.mxu0 0.0
        %484 = vmatpush1.msra.mxu0 0.0
        %485 = vmatprep.subr.mxu0 0.0
        %486 = vmatpush1.msra.mxu0 0.0
        %487 = vmatprep.subr.mxu0 0.0
        %488 = vmatpush1.msra.mxu0 0.0
        %489 = vmatprep.subr.mxu0 0.0
        %490 = vmatpush1.msra.mxu0 0.0
        %491 = vmatprep.subr.mxu0 0.0
        %492 = vmatpush1.msra.mxu0 0.0
        %493 = vmatprep.mubr.f32.mxu0 0.0
        %494 = vmatmul.mubr.f32.gmra.mrb[0].mxu0 %v424
        %v495 = vpop.f32.mrb[0].mxu0
        %v496 = vadd.f32 %v420, %v495
        %v497 = vpop.f32.mrb[0].mxu0
        %498 = vmatprep.mubr.f32.mxu0 0.0
        %499 = vmatmul.mubr.f32.gmra.mrb[0].mxu0 %v427
        %v500 = vpop.f32.mrb[0].mxu0
        %v501 = vadd.f32 %v420, %v500
        %v502 = vpop.f32.mrb[0].mxu0
        %503 = vdwg.mxu0
        %504 = vst [vmem:[#allocation3] sm:$0xff] %v496
        %505 = vst [vmem:[#allocation3 + $0x8] sm:$0xff] %v501
        %v506 = vld [vmem:[%s330] sm:$0xff]
        %v507 = vld [vmem:[%s330 + $0x8] sm:$0xff]
        %v508 = vld [vmem:[%s330 + $0x10] sm:$0xff]
        %v509 = vld [vmem:[%s330 + $0x18] sm:$0xff]
        %v510 = vld [vmem:[%s387] sm:$0x3]
        %v511 = vld [vmem:[%s391] sm:$0x3]
        %v512 = vld [vmem:[#allocation3] sm:$0x3]
        %v514 = vsel %vm422, %v510, 0
        %516 = vmatprep.subr.mxu0 0.0
        %517 = vmatpush1.msra.mxu0 %v506
        %518 = vmatprep.subr.mxu0 0.0
        %519 = vmatpush1.msra.mxu0 %v507
        %520 = vmatprep.subr.mxu0 0.0
        %521 = vmatpush1.msra.mxu0 %v508
        %522 = vmatprep.subr.mxu0 0.0
        %523 = vmatpush1.msra.mxu0 %v509
        %524 = vmatprep.subr.mxu0 0.0
        %525 = vmatpush1.msra.mxu0 0.0
        %526 = vmatprep.subr.mxu0 0.0
        %527 = vmatpush1.msra.mxu0 0.0
        %528 = vmatprep.subr.mxu0 0.0
        %529 = vmatpush1.msra.mxu0 0.0
        %530 = vmatprep.subr.mxu0 0.0
        %531 = vmatpush1.msra.mxu0 0.0
        %532 = vmatprep.subr.mxu0 0.0
        %533 = vmatpush1.msra.mxu0 0.0
        %534 = vmatprep.subr.mxu0 0.0
        %535 = vmatpush1.msra.mxu0 0.0
        %536 = vmatprep.subr.mxu0 0.0
        %537 = vmatpush1.msra.mxu0 0.0
        %538 = vmatprep.subr.mxu0 0.0
        %539 = vmatpush1.msra.mxu0 0.0
        %540 = vmatprep.subr.mxu0 0.0
        %541 = vmatpush1.msra.mxu0 0.0
        %542 = vmatprep.subr.mxu0 0.0
        %543 = vmatpush1.msra.mxu0 0.0
        %544 = vmatprep.subr.mxu0 0.0
        %545 = vmatpush1.msra.mxu0 0.0
        %546 = vmatprep.subr.mxu0 0.0
        %547 = vmatpush1.msra.mxu0 0.0
        %548 = vmatprep.subr.mxu0 0.0
        %549 = vmatpush1.msra.mxu0 0.0
        %550 = vmatprep.subr.mxu0 0.0
        %551 = vmatpush1.msra.mxu0 0.0
        %552 = vmatprep.subr.mxu0 0.0
        %553 = vmatpush1.msra.mxu0 0.0
        %554 = vmatprep.subr.mxu0 0.0
        %555 = vmatpush1.msra.mxu0 0.0
        %556 = vmatprep.subr.mxu0 0.0
        %557 = vmatpush1.msra.mxu0 0.0
        %558 = vmatprep.subr.mxu0 0.0
        %559 = vmatpush1.msra.mxu0 0.0
        %560 = vmatprep.subr.mxu0 0.0
        %561 = vmatpush1.msra.mxu0 0.0
        %562 = vmatprep.subr.mxu0 0.0
        %563 = vmatpush1.msra.mxu0 0.0
        %564 = vmatprep.subr.mxu0 0.0
        %565 = vmatpush1.msra.mxu0 0.0
        %566 = vmatprep.subr.mxu0 0.0
        %567 = vmatpush1.msra.mxu0 0.0
        %568 = vmatprep.subr.mxu0 0.0
        %569 = vmatpush1.msra.mxu0 0.0
        %570 = vmatprep.subr.mxu0 0.0
        %571 = vmatpush1.msra.mxu0 0.0
        %572 = vmatprep.subr.mxu0 0.0
        %573 = vmatpush1.msra.mxu0 0.0
        %574 = vmatprep.subr.mxu0 0.0
        %575 = vmatpush1.msra.mxu0 0.0
        %576 = vmatprep.subr.mxu0 0.0
        %577 = vmatpush1.msra.mxu0 0.0
        %578 = vmatprep.subr.mxu0 0.0
        %579 = vmatpush1.msra.mxu0 0.0
        %580 = vmatprep.mubr.f32.mxu0 0.0
        %581 = vmatmul.mubr.f32.gmra.mrb[0].mxu0 %v514
        %v582 = vpop.f32.mrb[0].mxu0
        %v583 = vadd.f32 0.0, %v582
        %v584 = vpop.f32.mrb[0].mxu0
        %585 = vdwg.mxu0
        %v586 = vadd.f32 %v512, %v583
        %v587 = vtanh.pop %v586
        %v588 = vadd.f32 %v587, 1.0
        %v589 = vmul.f32 %v588, 0.5
        %591 = vrot.lane.b32.xlu0 %v511, 32
        %v592 = vpop.permute.xlu0 %591
        %v594 = vmul.f32 %v589, %v592
        %596 = vrot.lane.b32.xlu0 %v587, 64
        %v597 = vpop.permute.xlu0 %596
        %v599 = vmul.f32 %v589, %v597
        %601 = vrot.lane.b32.xlu0 %v599, 32
        %v602 = vpop.permute.xlu0 %601
        %v604 = vadd.f32 %v594, %v602
        %v605 = vtanh.pop %v604
        %607 = vrot.lane.b32.xlu0 %v605, 64
        %v608 = vpop.permute.xlu0 %607
        %v610 = vmul.f32 %v589, %v608
        %612 = vrot.lane.b32.xlu0 %v610, 32
        %v613 = vpop.permute.xlu0 %612
        %vm615 = vcmask 254976
        %616 = vst.msk [vmem:[#allocation2] sm:$0x3] %vm615, %v613
        %s617 = scalar_lea.vmem [#allocation3], 2
        %v618 = vld [vmem:[%s617] sm:$0x3]
        %v619 = vsel %vm422, %v613, 0
        %621 = vmatprep.subr.mxu0 0.0
        %622 = vmatpush1.msra.mxu0 %v506
        %623 = vmatprep.subr.mxu0 0.0
        %624 = vmatpush1.msra.mxu0 %v507
        %625 = vmatprep.subr.mxu0 0.0
        %626 = vmatpush1.msra.mxu0 %v508
        %627 = vmatprep.subr.mxu0 0.0
        %628 = vmatpush1.msra.mxu0 %v509
        %629 = vmatprep.subr.mxu0 0.0
        %630 = vmatpush1.msra.mxu0 0.0
        %631 = vmatprep.subr.mxu0 0.0
        %632 = vmatpush1.msra.mxu0 0.0
        %633 = vmatprep.subr.mxu0 0.0
        %634 = vmatpush1.msra.mxu0 0.0
        %635 = vmatprep.subr.mxu0 0.0
        %636 = vmatpush1.msra.mxu0 0.0
        %637 = vmatprep.subr.mxu0 0.0
        %638 = vmatpush1.msra.mxu0 0.0
        %639 = vmatprep.subr.mxu0 0.0
        %640 = vmatpush1.msra.mxu0 0.0
        %641 = vmatprep.subr.mxu0 0.0
        %642 = vmatpush1.msra.mxu0 0.0
        %643 = vmatprep.subr.mxu0 0.0
        %644 = vmatpush1.msra.mxu0 0.0
        %645 = vmatprep.subr.mxu0 0.0
        %646 = vmatpush1.msra.mxu0 0.0
        %647 = vmatprep.subr.mxu0 0.0
        %648 = vmatpush1.msra.mxu0 0.0
        %649 = vmatprep.subr.mxu0 0.0
        %650 = vmatpush1.msra.mxu0 0.0
        %651 = vmatprep.subr.mxu0 0.0
        %652 = vmatpush1.msra.mxu0 0.0
        %653 = vmatprep.subr.mxu0 0.0
        %654 = vmatpush1.msra.mxu0 0.0
        %655 = vmatprep.subr.mxu0 0.0
        %656 = vmatpush1.msra.mxu0 0.0
        %657 = vmatprep.subr.mxu0 0.0
        %658 = vmatpush1.msra.mxu0 0.0
        %659 = vmatprep.subr.mxu0 0.0
        %660 = vmatpush1.msra.mxu0 0.0
        %661 = vmatprep.subr.mxu0 0.0
        %662 = vmatpush1.msra.mxu0 0.0
        %663 = vmatprep.subr.mxu0 0.0
        %664 = vmatpush1.msra.mxu0 0.0
        %665 = vmatprep.subr.mxu0 0.0
        %666 = vmatpush1.msra.mxu0 0.0
        %667 = vmatprep.subr.mxu0 0.0
        %668 = vmatpush1.msra.mxu0 0.0
        %669 = vmatprep.subr.mxu0 0.0
        %670 = vmatpush1.msra.mxu0 0.0
        %671 = vmatprep.subr.mxu0 0.0
        %672 = vmatpush1.msra.mxu0 0.0
        %673 = vmatprep.subr.mxu0 0.0
        %674 = vmatpush1.msra.mxu0 0.0
        %675 = vmatprep.subr.mxu0 0.0
        %676 = vmatpush1.msra.mxu0 0.0
        %677 = vmatprep.subr.mxu0 0.0
        %678 = vmatpush1.msra.mxu0 0.0
        %679 = vmatprep.subr.mxu0 0.0
        %680 = vmatpush1.msra.mxu0 0.0
        %681 = vmatprep.subr.mxu0 0.0
        %682 = vmatpush1.msra.mxu0 0.0
        %683 = vmatprep.subr.mxu0 0.0
        %684 = vmatpush1.msra.mxu0 0.0
        %685 = vmatprep.mubr.f32.mxu0 0.0
        %686 = vmatmul.mubr.f32.gmra.mrb[0].mxu0 %v619
        %v687 = vpop.f32.mrb[0].mxu0
        %v688 = vadd.f32 0.0, %v687
        %v689 = vpop.f32.mrb[0].mxu0
        %690 = vdwg.mxu0
        %v691 = vadd.f32 %v618, %v688
        %v692 = vtanh.pop %v691
        %v693 = vadd.f32 %v692, 1.0
        %v694 = vmul.f32 %v693, 0.5
        %v695 = vmul.f32 %v694, %v604
        %697 = vrot.lane.b32.xlu0 %v692, 64
        %v698 = vpop.permute.xlu0 %697
        %v700 = vmul.f32 %v694, %v698
        %702 = vrot.lane.b32.xlu0 %v700, 32
        %v703 = vpop.permute.xlu0 %702
        %v705 = vadd.f32 %v695, %v703
        %v706 = vtanh.pop %v705
        %708 = vrot.lane.b32.xlu0 %v706, 64
        %v709 = vpop.permute.xlu0 %708
        %v711 = vmul.f32 %v694, %v709
        %713 = vrot.lane.b32.xlu0 %v711, 32
        %v714 = vpop.permute.xlu0 %713
        %s716 = scalar_lea.vmem [#allocation2], 2
        %717 = vst.msk [vmem:[%s716] sm:$0x3] %vm615, %v714
        %s718 = scalar_lea.vmem [#allocation3], 4
        %v719 = vld [vmem:[%s718] sm:$0x3]
        %v720 = vsel %vm422, %v714, 0
        %722 = vmatprep.subr.mxu0 0.0
        %723 = vmatpush1.msra.mxu0 %v506
        %724 = vmatprep.subr.mxu0 0.0
        %725 = vmatpush1.msra.mxu0 %v507
        %726 = vmatprep.subr.mxu0 0.0
        %727 = vmatpush1.msra.mxu0 %v508
        %728 = vmatprep.subr.mxu0 0.0
        %729 = vmatpush1.msra.mxu0 %v509
        %730 = vmatprep.subr.mxu0 0.0
        %731 = vmatpush1.msra.mxu0 0.0
        %732 = vmatprep.subr.mxu0 0.0
        %733 = vmatpush1.msra.mxu0 0.0
        %734 = vmatprep.subr.mxu0 0.0
        %735 = vmatpush1.msra.mxu0 0.0
        %736 = vmatprep.subr.mxu0 0.0
        %737 = vmatpush1.msra.mxu0 0.0
        %738 = vmatprep.subr.mxu0 0.0
        %739 = vmatpush1.msra.mxu0 0.0
        %740 = vmatprep.subr.mxu0 0.0
        %741 = vmatpush1.msra.mxu0 0.0
        %742 = vmatprep.subr.mxu0 0.0
        %743 = vmatpush1.msra.mxu0 0.0
        %744 = vmatprep.subr.mxu0 0.0
        %745 = vmatpush1.msra.mxu0 0.0
        %746 = vmatprep.subr.mxu0 0.0
        %747 = vmatpush1.msra.mxu0 0.0
        %748 = vmatprep.subr.mxu0 0.0
        %749 = vmatpush1.msra.mxu0 0.0
        %750 = vmatprep.subr.mxu0 0.0
        %751 = vmatpush1.msra.mxu0 0.0
        %752 = vmatprep.subr.mxu0 0.0
        %753 = vmatpush1.msra.mxu0 0.0
        %754 = vmatprep.subr.mxu0 0.0
        %755 = vmatpush1.msra.mxu0 0.0
        %756 = vmatprep.subr.mxu0 0.0
        %757 = vmatpush1.msra.mxu0 0.0
        %758 = vmatprep.subr.mxu0 0.0
        %759 = vmatpush1.msra.mxu0 0.0
        %760 = vmatprep.subr.mxu0 0.0
        %761 = vmatpush1.msra.mxu0 0.0
        %762 = vmatprep.subr.mxu0 0.0
        %763 = vmatpush1.msra.mxu0 0.0
        %764 = vmatprep.subr.mxu0 0.0
        %765 = vmatpush1.msra.mxu0 0.0
        %766 = vmatprep.subr.mxu0 0.0
        %767 = vmatpush1.msra.mxu0 0.0
        %768 = vmatprep.subr.mxu0 0.0
        %769 = vmatpush1.msra.mxu0 0.0
        %770 = vmatprep.subr.mxu0 0.0
        %771 = vmatpush1.msra.mxu0 0.0
        %772 = vmatprep.subr.mxu0 0.0
        %773 = vmatpush1.msra.mxu0 0.0
        %774 = vmatprep.subr.mxu0 0.0
        %775 = vmatpush1.msra.mxu0 0.0
        %776 = vmatprep.subr.mxu0 0.0
        %777 = vmatpush1.msra.mxu0 0.0
        %778 = vmatprep.subr.mxu0 0.0
        %779 = vmatpush1.msra.mxu0 0.0
        %780 = vmatprep.subr.mxu0 0.0
        %781 = vmatpush1.msra.mxu0 0.0
        %782 = vmatprep.subr.mxu0 0.0
        %783 = vmatpush1.msra.mxu0 0.0
        %784 = vmatprep.subr.mxu0 0.0
        %785 = vmatpush1.msra.mxu0 0.0
        %786 = vmatprep.mubr.f32.mxu0 0.0
        %787 = vmatmul.mubr.f32.gmra.mrb[0].mxu0 %v720
        %v788 = vpop.f32.mrb[0].mxu0
        %v789 = vadd.f32 0.0, %v788
        %v790 = vpop.f32.mrb[0].mxu0
        %791 = vdwg.mxu0
        %v792 = vadd.f32 %v719, %v789
        %v793 = vtanh.pop %v792
        %v794 = vadd.f32 %v793, 1.0
        %v795 = vmul.f32 %v794, 0.5
        %v796 = vmul.f32 %v795, %v705
        %798 = vrot.lane.b32.xlu0 %v793, 64
        %v799 = vpop.permute.xlu0 %798
        %v801 = vmul.f32 %v795, %v799
        %803 = vrot.lane.b32.xlu0 %v801, 32
        %v804 = vpop.permute.xlu0 %803
        %v806 = vadd.f32 %v796, %v804
        %v807 = vtanh.pop %v806
        %809 = vrot.lane.b32.xlu0 %v807, 64
        %v810 = vpop.permute.xlu0 %809
        %v812 = vmul.f32 %v795, %v810
        %814 = vrot.lane.b32.xlu0 %v812, 32
        %v815 = vpop.permute.xlu0 %814
        %s817 = scalar_lea.vmem [#allocation2], 4
        %818 = vst.msk [vmem:[%s817] sm:$0x3] %vm615, %v815
        %s819 = scalar_lea.vmem [#allocation3], 6
        %v820 = vld [vmem:[%s819] sm:$0x3]
        %v821 = vsel %vm422, %v815, 0
        %823 = vmatprep.subr.mxu0 0.0
        %824 = vmatpush1.msra.mxu0 %v506
        %825 = vmatprep.subr.mxu0 0.0
        %826 = vmatpush1.msra.mxu0 %v507
        %827 = vmatprep.subr.mxu0 0.0
        %828 = vmatpush1.msra.mxu0 %v508
        %829 = vmatprep.subr.mxu0 0.0
        %830 = vmatpush1.msra.mxu0 %v509
        %831 = vmatprep.subr.mxu0 0.0
        %832 = vmatpush1.msra.mxu0 0.0
        %833 = vmatprep.subr.mxu0 0.0
        %834 = vmatpush1.msra.mxu0 0.0
        %835 = vmatprep.subr.mxu0 0.0
        %836 = vmatpush1.msra.mxu0 0.0
        %837 = vmatprep.subr.mxu0 0.0
        %838 = vmatpush1.msra.mxu0 0.0
        %839 = vmatprep.subr.mxu0 0.0
        %840 = vmatpush1.msra.mxu0 0.0
        %841 = vmatprep.subr.mxu0 0.0
        %842 = vmatpush1.msra.mxu0 0.0
        %843 = vmatprep.subr.mxu0 0.0
        %844 = vmatpush1.msra.mxu0 0.0
        %845 = vmatprep.subr.mxu0 0.0
        %846 = vmatpush1.msra.mxu0 0.0
        %847 = vmatprep.subr.mxu0 0.0
        %848 = vmatpush1.msra.mxu0 0.0
        %849 = vmatprep.subr.mxu0 0.0
        %850 = vmatpush1.msra.mxu0 0.0
        %851 = vmatprep.subr.mxu0 0.0
        %852 = vmatpush1.msra.mxu0 0.0
        %853 = vmatprep.subr.mxu0 0.0
        %854 = vmatpush1.msra.mxu0 0.0
        %855 = vmatprep.subr.mxu0 0.0
        %856 = vmatpush1.msra.mxu0 0.0
        %857 = vmatprep.subr.mxu0 0.0
        %858 = vmatpush1.msra.mxu0 0.0
        %859 = vmatprep.subr.mxu0 0.0
        %860 = vmatpush1.msra.mxu0 0.0
        %861 = vmatprep.subr.mxu0 0.0
        %862 = vmatpush1.msra.mxu0 0.0
        %863 = vmatprep.subr.mxu0 0.0
        %864 = vmatpush1.msra.mxu0 0.0
        %865 = vmatprep.subr.mxu0 0.0
        %866 = vmatpush1.msra.mxu0 0.0
        %867 = vmatprep.subr.mxu0 0.0
        %868 = vmatpush1.msra.mxu0 0.0
        %869 = vmatprep.subr.mxu0 0.0
        %870 = vmatpush1.msra.mxu0 0.0
        %871 = vmatprep.subr.mxu0 0.0
        %872 = vmatpush1.msra.mxu0 0.0
        %873 = vmatprep.subr.mxu0 0.0
        %874 = vmatpush1.msra.mxu0 0.0
        %875 = vmatprep.subr.mxu0 0.0
        %876 = vmatpush1.msra.mxu0 0.0
        %877 = vmatprep.subr.mxu0 0.0
        %878 = vmatpush1.msra.mxu0 0.0
        %879 = vmatprep.subr.mxu0 0.0
        %880 = vmatpush1.msra.mxu0 0.0
        %881 = vmatprep.subr.mxu0 0.0
        %882 = vmatpush1.msra.mxu0 0.0
        %883 = vmatprep.subr.mxu0 0.0
        %884 = vmatpush1.msra.mxu0 0.0
        %885 = vmatprep.subr.mxu0 0.0
        %886 = vmatpush1.msra.mxu0 0.0
        %887 = vmatprep.mubr.f32.mxu0 0.0
        %888 = vmatmul.mubr.f32.gmra.mrb[0].mxu0 %v821
        %v889 = vpop.f32.mrb[0].mxu0
        %v890 = vadd.f32 0.0, %v889
        %v891 = vpop.f32.mrb[0].mxu0
        %892 = vdwg.mxu0
        %v893 = vadd.f32 %v820, %v890
        %v894 = vtanh.pop %v893
        %v895 = vadd.f32 %v894, 1.0
        %v896 = vmul.f32 %v895, 0.5
        %v897 = vmul.f32 %v896, %v806
        %899 = vrot.lane.b32.xlu0 %v894, 64
        %v900 = vpop.permute.xlu0 %899
        %v902 = vmul.f32 %v896, %v900
        %904 = vrot.lane.b32.xlu0 %v902, 32
        %v905 = vpop.permute.xlu0 %904
        %v907 = vadd.f32 %v897, %v905
        %v908 = vtanh.pop %v907
        %910 = vrot.lane.b32.xlu0 %v908, 64
        %v911 = vpop.permute.xlu0 %910
        %v913 = vmul.f32 %v896, %v911
        %915 = vrot.lane.b32.xlu0 %v913, 32
        %v916 = vpop.permute.xlu0 %915
        %s918 = scalar_lea.vmem [#allocation2], 6
        %919 = vst.msk [vmem:[%s918] sm:$0x3] %vm615, %v916
        %s920 = scalar_lea.vmem [#allocation3], 8
        %v921 = vld [vmem:[%s920] sm:$0x3]
        %v922 = vsel %vm422, %v916, 0
        %924 = vmatprep.subr.mxu0 0.0
        %925 = vmatpush1.msra.mxu0 %v506
        %926 = vmatprep.subr.mxu0 0.0
        %927 = vmatpush1.msra.mxu0 %v507
        %928 = vmatprep.subr.mxu0 0.0
        %929 = vmatpush1.msra.mxu0 %v508
        %930 = vmatprep.subr.mxu0 0.0
        %931 = vmatpush1.msra.mxu0 %v509
        %932 = vmatprep.subr.mxu0 0.0
        %933 = vmatpush1.msra.mxu0 0.0
        %934 = vmatprep.subr.mxu0 0.0
        %935 = vmatpush1.msra.mxu0 0.0
        %936 = vmatprep.subr.mxu0 0.0
        %937 = vmatpush1.msra.mxu0 0.0
        %938 = vmatprep.subr.mxu0 0.0
        %939 = vmatpush1.msra.mxu0 0.0
        %940 = vmatprep.subr.mxu0 0.0
        %941 = vmatpush1.msra.mxu0 0.0
        %942 = vmatprep.subr.mxu0 0.0
        %943 = vmatpush1.msra.mxu0 0.0
        %944 = vmatprep.subr.mxu0 0.0
        %945 = vmatpush1.msra.mxu0 0.0
        %946 = vmatprep.subr.mxu0 0.0
        %947 = vmatpush1.msra.mxu0 0.0
        %948 = vmatprep.subr.mxu0 0.0
        %949 = vmatpush1.msra.mxu0 0.0
        %950 = vmatprep.subr.mxu0 0.0
        %951 = vmatpush1.msra.mxu0 0.0
        %952 = vmatprep.subr.mxu0 0.0
        %953 = vmatpush1.msra.mxu0 0.0
        %954 = vmatprep.subr.mxu0 0.0
        %955 = vmatpush1.msra.mxu0 0.0
        %956 = vmatprep.subr.mxu0 0.0
        %957 = vmatpush1.msra.mxu0 0.0
        %958 = vmatprep.subr.mxu0 0.0
        %959 = vmatpush1.msra.mxu0 0.0
        %960 = vmatprep.subr.mxu0 0.0
        %961 = vmatpush1.msra.mxu0 0.0
        %962 = vmatprep.subr.mxu0 0.0
        %963 = vmatpush1.msra.mxu0 0.0
        %964 = vmatprep.subr.mxu0 0.0
        %965 = vmatpush1.msra.mxu0 0.0
        %966 = vmatprep.subr.mxu0 0.0
        %967 = vmatpush1.msra.mxu0 0.0
        %968 = vmatprep.subr.mxu0 0.0
        %969 = vmatpush1.msra.mxu0 0.0
        %970 = vmatprep.subr.mxu0 0.0
        %971 = vmatpush1.msra.mxu0 0.0
        %972 = vmatprep.subr.mxu0 0.0
        %973 = vmatpush1.msra.mxu0 0.0
        %974 = vmatprep.subr.mxu0 0.0
        %975 = vmatpush1.msra.mxu0 0.0
        %976 = vmatprep.subr.mxu0 0.0
        %977 = vmatpush1.msra.mxu0 0.0
        %978 = vmatprep.subr.mxu0 0.0
        %979 = vmatpush1.msra.mxu0 0.0
        %980 = vmatprep.subr.mxu0 0.0
        %981 = vmatpush1.msra.mxu0 0.0
        %982 = vmatprep.subr.mxu0 0.0
        %983 = vmatpush1.msra.mxu0 0.0
        %984 = vmatprep.subr.mxu0 0.0
        %985 = vmatpush1.msra.mxu0 0.0
        %986 = vmatprep.subr.mxu0 0.0
        %987 = vmatpush1.msra.mxu0 0.0
        %988 = vmatprep.mubr.f32.mxu0 0.0
        %989 = vmatmul.mubr.f32.gmra.mrb[0].mxu0 %v922
        %v990 = vpop.f32.mrb[0].mxu0
        %v991 = vadd.f32 0.0, %v990
        %v992 = vpop.f32.mrb[0].mxu0
        %993 = vdwg.mxu0
        %v994 = vadd.f32 %v921, %v991
        %v995 = vtanh.pop %v994
        %v996 = vadd.f32 %v995, 1.0
        %v997 = vmul.f32 %v996, 0.5
        %v998 = vmul.f32 %v997, %v907
        %1000 = vrot.lane.b32.xlu0 %v995, 64
        %v1001 = vpop.permute.xlu0 %1000
        %v1003 = vmul.f32 %v997, %v1001
        %1005 = vrot.lane.b32.xlu0 %v1003, 32
        %v1006 = vpop.permute.xlu0 %1005
        %v1008 = vadd.f32 %v998, %v1006
        %v1009 = vtanh.pop %v1008
        %1011 = vrot.lane.b32.xlu0 %v1009, 64
        %v1012 = vpop.permute.xlu0 %1011
        %v1014 = vmul.f32 %v997, %v1012
        %1016 = vrot.lane.b32.xlu0 %v1014, 32
        %v1017 = vpop.permute.xlu0 %1016
        %s1019 = scalar_lea.vmem [#allocation2], 8
        %1020 = vst.msk [vmem:[%s1019] sm:$0x3] %vm615, %v1017
        %s1021 = scalar_lea.vmem [#allocation3], 10
        %v1022 = vld [vmem:[%s1021] sm:$0x3]
        %v1023 = vsel %vm422, %v1017, 0
        %1025 = vmatprep.subr.mxu0 0.0
        %1026 = vmatpush1.msra.mxu0 %v506
        %1027 = vmatprep.subr.mxu0 0.0
        %1028 = vmatpush1.msra.mxu0 %v507
        %1029 = vmatprep.subr.mxu0 0.0
        %1030 = vmatpush1.msra.mxu0 %v508
        %1031 = vmatprep.subr.mxu0 0.0
        %1032 = vmatpush1.msra.mxu0 %v509
        %1033 = vmatprep.subr.mxu0 0.0
        %1034 = vmatpush1.msra.mxu0 0.0
        %1035 = vmatprep.subr.mxu0 0.0
        %1036 = vmatpush1.msra.mxu0 0.0
        %1037 = vmatprep.subr.mxu0 0.0
        %1038 = vmatpush1.msra.mxu0 0.0
        %1039 = vmatprep.subr.mxu0 0.0
        %1040 = vmatpush1.msra.mxu0 0.0
        %1041 = vmatprep.subr.mxu0 0.0
        %1042 = vmatpush1.msra.mxu0 0.0
        %1043 = vmatprep.subr.mxu0 0.0
        %1044 = vmatpush1.msra.mxu0 0.0
        %1045 = vmatprep.subr.mxu0 0.0
        %1046 = vmatpush1.msra.mxu0 0.0
        %1047 = vmatprep.subr.mxu0 0.0
        %1048 = vmatpush1.msra.mxu0 0.0
        %1049 = vmatprep.subr.mxu0 0.0
        %1050 = vmatpush1.msra.mxu0 0.0
        %1051 = vmatprep.subr.mxu0 0.0
        %1052 = vmatpush1.msra.mxu0 0.0
        %1053 = vmatprep.subr.mxu0 0.0
        %1054 = vmatpush1.msra.mxu0 0.0
        %1055 = vmatprep.subr.mxu0 0.0
        %1056 = vmatpush1.msra.mxu0 0.0
        %1057 = vmatprep.subr.mxu0 0.0
        %1058 = vmatpush1.msra.mxu0 0.0
        %1059 = vmatprep.subr.mxu0 0.0
        %1060 = vmatpush1.msra.mxu0 0.0
        %1061 = vmatprep.subr.mxu0 0.0
        %1062 = vmatpush1.msra.mxu0 0.0
        %1063 = vmatprep.subr.mxu0 0.0
        %1064 = vmatpush1.msra.mxu0 0.0
        %1065 = vmatprep.subr.mxu0 0.0
        %1066 = vmatpush1.msra.mxu0 0.0
        %1067 = vmatprep.subr.mxu0 0.0
        %1068 = vmatpush1.msra.mxu0 0.0
        %1069 = vmatprep.subr.mxu0 0.0
        %1070 = vmatpush1.msra.mxu0 0.0
        %1071 = vmatprep.subr.mxu0 0.0
        %1072 = vmatpush1.msra.mxu0 0.0
        %1073 = vmatprep.subr.mxu0 0.0
        %1074 = vmatpush1.msra.mxu0 0.0
        %1075 = vmatprep.subr.mxu0 0.0
        %1076 = vmatpush1.msra.mxu0 0.0
        %1077 = vmatprep.subr.mxu0 0.0
        %1078 = vmatpush1.msra.mxu0 0.0
        %1079 = vmatprep.subr.mxu0 0.0
        %1080 = vmatpush1.msra.mxu0 0.0
        %1081 = vmatprep.subr.mxu0 0.0
        %1082 = vmatpush1.msra.mxu0 0.0
        %1083 = vmatprep.subr.mxu0 0.0
        %1084 = vmatpush1.msra.mxu0 0.0
        %1085 = vmatprep.subr.mxu0 0.0
        %1086 = vmatpush1.msra.mxu0 0.0
        %1087 = vmatprep.subr.mxu0 0.0
        %1088 = vmatpush1.msra.mxu0 0.0
        %1089 = vmatprep.mubr.f32.mxu0 0.0
        %1090 = vmatmul.mubr.f32.gmra.mrb[0].mxu0 %v1023
        %v1091 = vpop.f32.mrb[0].mxu0
        %v1092 = vadd.f32 0.0, %v1091
        %v1093 = vpop.f32.mrb[0].mxu0
        %1094 = vdwg.mxu0
        %v1095 = vadd.f32 %v1022, %v1092
        %v1096 = vtanh.pop %v1095
        %v1097 = vadd.f32 %v1096, 1.0
        %v1098 = vmul.f32 %v1097, 0.5
        %v1099 = vmul.f32 %v1098, %v1008
        %1101 = vrot.lane.b32.xlu0 %v1096, 64
        %v1102 = vpop.permute.xlu0 %1101
        %v1104 = vmul.f32 %v1098, %v1102
        %1106 = vrot.lane.b32.xlu0 %v1104, 32
        %v1107 = vpop.permute.xlu0 %1106
        %v1109 = vadd.f32 %v1099, %v1107
        %v1110 = vtanh.pop %v1109
        %1112 = vrot.lane.b32.xlu0 %v1110, 64
        %v1113 = vpop.permute.xlu0 %1112
        %v1115 = vmul.f32 %v1098, %v1113
        %1117 = vrot.lane.b32.xlu0 %v1115, 32
        %v1118 = vpop.permute.xlu0 %1117
        %s1120 = scalar_lea.vmem [#allocation2], 10
        %1121 = vst.msk [vmem:[%s1120] sm:$0x3] %vm615, %v1118
        %s1122 = scalar_lea.vmem [#allocation3], 12
        %v1123 = vld [vmem:[%s1122] sm:$0x3]
        %v1124 = vsel %vm422, %v1118, 0
        %1126 = vmatprep.subr.mxu0 0.0
        %1127 = vmatpush1.msra.mxu0 %v506
        %1128 = vmatprep.subr.mxu0 0.0
        %1129 = vmatpush1.msra.mxu0 %v507
        %1130 = vmatprep.subr.mxu0 0.0
        %1131 = vmatpush1.msra.mxu0 %v508
        %1132 = vmatprep.subr.mxu0 0.0
        %1133 = vmatpush1.msra.mxu0 %v509
        %1134 = vmatprep.subr.mxu0 0.0
        %1135 = vmatpush1.msra.mxu0 0.0
        %1136 = vmatprep.subr.mxu0 0.0
        %1137 = vmatpush1.msra.mxu0 0.0
        %1138 = vmatprep.subr.mxu0 0.0
        %1139 = vmatpush1.msra.mxu0 0.0
        %1140 = vmatprep.subr.mxu0 0.0
        %1141 = vmatpush1.msra.mxu0 0.0
        %1142 = vmatprep.subr.mxu0 0.0
        %1143 = vmatpush1.msra.mxu0 0.0
        %1144 = vmatprep.subr.mxu0 0.0
        %1145 = vmatpush1.msra.mxu0 0.0
        %1146 = vmatprep.subr.mxu0 0.0
        %1147 = vmatpush1.msra.mxu0 0.0
        %1148 = vmatprep.subr.mxu0 0.0
        %1149 = vmatpush1.msra.mxu0 0.0
        %1150 = vmatprep.subr.mxu0 0.0
        %1151 = vmatpush1.msra.mxu0 0.0
        %1152 = vmatprep.subr.mxu0 0.0
        %1153 = vmatpush1.msra.mxu0 0.0
        %1154 = vmatprep.subr.mxu0 0.0
        %1155 = vmatpush1.msra.mxu0 0.0
        %1156 = vmatprep.subr.mxu0 0.0
        %1157 = vmatpush1.msra.mxu0 0.0
        %1158 = vmatprep.subr.mxu0 0.0
        %1159 = vmatpush1.msra.mxu0 0.0
        %1160 = vmatprep.subr.mxu0 0.0
        %1161 = vmatpush1.msra.mxu0 0.0
        %1162 = vmatprep.subr.mxu0 0.0
        %1163 = vmatpush1.msra.mxu0 0.0
        %1164 = vmatprep.subr.mxu0 0.0
        %1165 = vmatpush1.msra.mxu0 0.0
        %1166 = vmatprep.subr.mxu0 0.0
        %1167 = vmatpush1.msra.mxu0 0.0
        %1168 = vmatprep.subr.mxu0 0.0
        %1169 = vmatpush1.msra.mxu0 0.0
        %1170 = vmatprep.subr.mxu0 0.0
        %1171 = vmatpush1.msra.mxu0 0.0
        %1172 = vmatprep.subr.mxu0 0.0
        %1173 = vmatpush1.msra.mxu0 0.0
        %1174 = vmatprep.subr.mxu0 0.0
        %1175 = vmatpush1.msra.mxu0 0.0
        %1176 = vmatprep.subr.mxu0 0.0
        %1177 = vmatpush1.msra.mxu0 0.0
        %1178 = vmatprep.subr.mxu0 0.0
        %1179 = vmatpush1.msra.mxu0 0.0
        %1180 = vmatprep.subr.mxu0 0.0
        %1181 = vmatpush1.msra.mxu0 0.0
        %1182 = vmatprep.subr.mxu0 0.0
        %1183 = vmatpush1.msra.mxu0 0.0
        %1184 = vmatprep.subr.mxu0 0.0
        %1185 = vmatpush1.msra.mxu0 0.0
        %1186 = vmatprep.subr.mxu0 0.0
        %1187 = vmatpush1.msra.mxu0 0.0
        %1188 = vmatprep.subr.mxu0 0.0
        %1189 = vmatpush1.msra.mxu0 0.0
        %1190 = vmatprep.mubr.f32.mxu0 0.0
        %1191 = vmatmul.mubr.f32.gmra.mrb[0].mxu0 %v1124
        %v1192 = vpop.f32.mrb[0].mxu0
        %v1193 = vadd.f32 0.0, %v1192
        %v1194 = vpop.f32.mrb[0].mxu0
        %1195 = vdwg.mxu0
        %v1196 = vadd.f32 %v1123, %v1193
        %v1197 = vtanh.pop %v1196
        %v1198 = vadd.f32 %v1197, 1.0
        %v1199 = vmul.f32 %v1198, 0.5
        %v1200 = vmul.f32 %v1199, %v1109
        %1202 = vrot.lane.b32.xlu0 %v1197, 64
        %v1203 = vpop.permute.xlu0 %1202
        %v1205 = vmul.f32 %v1199, %v1203
        %1207 = vrot.lane.b32.xlu0 %v1205, 32
        %v1208 = vpop.permute.xlu0 %1207
        %v1210 = vadd.f32 %v1200, %v1208
        %v1211 = vtanh.pop %v1210
        %1213 = vrot.lane.b32.xlu0 %v1211, 64
        %v1214 = vpop.permute.xlu0 %1213
        %v1216 = vmul.f32 %v1199, %v1214
        %1218 = vrot.lane.b32.xlu0 %v1216, 32
        %v1219 = vpop.permute.xlu0 %1218
        %s1221 = scalar_lea.vmem [#allocation2], 12
        %1222 = vst.msk [vmem:[%s1221] sm:$0x3] %vm615, %v1219
        %s1223 = scalar_lea.vmem [#allocation3], 14
        %v1224 = vld [vmem:[%s1223] sm:$0x3]
        %v1225 = vsel %vm422, %v1219, 0
        %1227 = vmatprep.subr.mxu0 0.0
        %1228 = vmatpush1.msra.mxu0 %v506
        %1229 = vmatprep.subr.mxu0 0.0
        %1230 = vmatpush1.msra.mxu0 %v507
        %1231 = vmatprep.subr.mxu0 0.0
        %1232 = vmatpush1.msra.mxu0 %v508
        %1233 = vmatprep.subr.mxu0 0.0
        %1234 = vmatpush1.msra.mxu0 %v509
        %1235 = vmatprep.subr.mxu0 0.0
        %1236 = vmatpush1.msra.mxu0 0.0
        %1237 = vmatprep.subr.mxu0 0.0
        %1238 = vmatpush1.msra.mxu0 0.0
        %1239 = vmatprep.subr.mxu0 0.0
        %1240 = vmatpush1.msra.mxu0 0.0
        %1241 = vmatprep.subr.mxu0 0.0
        %1242 = vmatpush1.msra.mxu0 0.0
        %1243 = vmatprep.subr.mxu0 0.0
        %1244 = vmatpush1.msra.mxu0 0.0
        %1245 = vmatprep.subr.mxu0 0.0
        %1246 = vmatpush1.msra.mxu0 0.0
        %1247 = vmatprep.subr.mxu0 0.0
        %1248 = vmatpush1.msra.mxu0 0.0
        %1249 = vmatprep.subr.mxu0 0.0
        %1250 = vmatpush1.msra.mxu0 0.0
        %1251 = vmatprep.subr.mxu0 0.0
        %1252 = vmatpush1.msra.mxu0 0.0
        %1253 = vmatprep.subr.mxu0 0.0
        %1254 = vmatpush1.msra.mxu0 0.0
        %1255 = vmatprep.subr.mxu0 0.0
        %1256 = vmatpush1.msra.mxu0 0.0
        %1257 = vmatprep.subr.mxu0 0.0
        %1258 = vmatpush1.msra.mxu0 0.0
        %1259 = vmatprep.subr.mxu0 0.0
        %1260 = vmatpush1.msra.mxu0 0.0
        %1261 = vmatprep.subr.mxu0 0.0
        %1262 = vmatpush1.msra.mxu0 0.0
        %1263 = vmatprep.subr.mxu0 0.0
        %1264 = vmatpush1.msra.mxu0 0.0
        %1265 = vmatprep.subr.mxu0 0.0
        %1266 = vmatpush1.msra.mxu0 0.0
        %1267 = vmatprep.subr.mxu0 0.0
        %1268 = vmatpush1.msra.mxu0 0.0
        %1269 = vmatprep.subr.mxu0 0.0
        %1270 = vmatpush1.msra.mxu0 0.0
        %1271 = vmatprep.subr.mxu0 0.0
        %1272 = vmatpush1.msra.mxu0 0.0
        %1273 = vmatprep.subr.mxu0 0.0
        %1274 = vmatpush1.msra.mxu0 0.0
        %1275 = vmatprep.subr.mxu0 0.0
        %1276 = vmatpush1.msra.mxu0 0.0
        %1277 = vmatprep.subr.mxu0 0.0
        %1278 = vmatpush1.msra.mxu0 0.0
        %1279 = vmatprep.subr.mxu0 0.0
        %1280 = vmatpush1.msra.mxu0 0.0
        %1281 = vmatprep.subr.mxu0 0.0
        %1282 = vmatpush1.msra.mxu0 0.0
        %1283 = vmatprep.subr.mxu0 0.0
        %1284 = vmatpush1.msra.mxu0 0.0
        %1285 = vmatprep.subr.mxu0 0.0
        %1286 = vmatpush1.msra.mxu0 0.0
        %1287 = vmatprep.subr.mxu0 0.0
        %1288 = vmatpush1.msra.mxu0 0.0
        %1289 = vmatprep.subr.mxu0 0.0
        %1290 = vmatpush1.msra.mxu0 0.0
        %1291 = vmatprep.mubr.f32.mxu0 0.0
        %1292 = vmatmul.mubr.f32.gmra.mrb[0].mxu0 %v1225
        %v1293 = vpop.f32.mrb[0].mxu0
        %v1294 = vadd.f32 0.0, %v1293
        %v1295 = vpop.f32.mrb[0].mxu0
        %1296 = vdwg.mxu0
        %v1297 = vadd.f32 %v1224, %v1294
        %v1298 = vtanh.pop %v1297
        %v1299 = vadd.f32 %v1298, 1.0
        %v1300 = vmul.f32 %v1299, 0.5
        %v1301 = vmul.f32 %v1300, %v1210
        %1303 = vrot.lane.b32.xlu0 %v1298, 64
        %v1304 = vpop.permute.xlu0 %1303
        %v1306 = vmul.f32 %v1300, %v1304
        %1308 = vrot.lane.b32.xlu0 %v1306, 32
        %v1309 = vpop.permute.xlu0 %1308
        %v1311 = vadd.f32 %v1301, %v1309
        %v1312 = vtanh.pop %v1311
        %1314 = vrot.lane.b32.xlu0 %v1312, 64
        %v1315 = vpop.permute.xlu0 %1314
        %v1317 = vmul.f32 %v1300, %v1315
        %1319 = vrot.lane.b32.xlu0 %v1317, 32
        %v1320 = vpop.permute.xlu0 %1319
        %s1322 = scalar_lea.vmem [#allocation2], 14
        %1323 = vst.msk [vmem:[%s1322] sm:$0x3] %vm615, %v1320
        %1324 = vst.msk [vmem:[%s376] sm:$0x3] %vm615, %v1320
        %1326 = vrot.lane.b32.xlu0 %v1311, 96
        %v1327 = vpop.permute.xlu0 %1326
        %1329 = vst.msk [vmem:[%s383] sm:$0x3] %vm615, %v1327
        %p1330 = scmp.eq.s32.totalorder %s29, 1
        // Predicated region
        $region53: #{_lstm_forward.1} parent=43 // pred_check
          %p1331 = pneg %p1330
        $region54: #{_lstm_forward.1} parent=43 // pred_check_branch
          %1333 = sbr.rel (%p1331) target = $region56
        $region55: #{_lstm_forward.1} parent=43 // pred_region
          %v1334 = vld [vmem:[#allocation2] sm:$0xff]
          %v1335 = vld [vmem:[#allocation2 + $0x8] sm:$0xff]
          %1336 = vst.msk [vmem:[%s6] sm:$0xff] %vm422, %v1334
          %1337 = vst.msk [vmem:[%s6 + $0x8] sm:$0xff] %vm422, %v1335
        $region56: #{_lstm_forward.1} parent=43 // pred_fallthru
          _
        %s1338 = sand.u32 %s209, 1
        %s1339 = scalar_lea.sflag [#allocation6], %s1338
        %s1340 = sand.u32 %s209, 1
        %s1341 = smul.addr %s1340, 2
        %s1342 = scalar_lea.vmem [#allocation7], %s1341
        %s1343 = sand.u32 %s235, 1
        %s1344 = scalar_lea.sflag [#allocation9], %s1343
        %s1345 = sand.u32 %s235, 1
        %s1346 = smul.addr %s1345, 2
        %s1347 = scalar_lea.vmem [#allocation8], %s1346
        // Predicated region
        $region57: #{_lstm_forward.1} parent=43 // pred_check
          %p1348 = pneg %p193
        $region58: #{_lstm_forward.1} parent=43 // pred_check_branch
          %1350 = sbr.rel (%p1348) target = $region60
        $region59: #{_lstm_forward.1} parent=43 // pred_region
          _
        $region60: #{_lstm_forward.1} parent=43 // pred_fallthru
          _
        // Predicated region
        $region61: #{_lstm_forward.1} parent=43 // pred_check
          %p1351 = pneg %p219
        $region62: #{_lstm_forward.1} parent=43 // pred_check_branch
          %1353 = sbr.rel (%p1351) target = $region64
        $region63: #{_lstm_forward.1} parent=43 // pred_region
          %s1355 = ssub.s32 32, 32
          %1356 = vsyncadd %s1339, %s1355
          %s1357 = smul.addr %s29, 32
          %s1358 = scalar_lea.hbm %s7, %s1357
          %s1360 = sshll.u32 %s1342, 4
          %s1361 = int_to_ptr.vmem [resolvable:$true] %s1360
          %1363 = dma.vmem_to_hbm [thread:$0]  %s1361, 32, %s1358, %s1339
        $region64: #{_lstm_forward.1} parent=43 // pred_fallthru
          _
        // Predicated region
        $region65: #{_lstm_forward.1} parent=43 // pred_check
          %p1364 = pneg %p245
        $region66: #{_lstm_forward.1} parent=43 // pred_check_branch
          %1366 = sbr.rel (%p1364) target = $region68
        $region67: #{_lstm_forward.1} parent=43 // pred_region
          %s1368 = ssub.s32 32, 32
          %1369 = vsyncadd %s1344, %s1368
          %s1370 = smul.addr %s29, 32
          %s1371 = scalar_lea.hbm %s8, %s1370
          %s1373 = sshll.u32 %s1347, 4
          %s1374 = int_to_ptr.vmem [resolvable:$true] %s1373
          %1376 = dma.vmem_to_hbm [thread:$0]  %s1374, 32, %s1371, %s1344
        $region68: #{_lstm_forward.1} parent=43 // pred_fallthru
          _
        // Predicated region
        $region69: #{_lstm_forward.1} parent=43 // pred_check
          %p1377 = pneg %p193
        $region70: #{_lstm_forward.1} parent=43 // pred_check_branch
          %1379 = sbr.rel (%p1377) target = $region72
        $region71: #{_lstm_forward.1} parent=43 // pred_region
          _
        $region72: #{_lstm_forward.1} parent=43 // pred_fallthru
          _
      $region44: #{_lstm_forward.1} parent=5 // pred_fallthru
        _
      %p1380 = scmp.le.s32.totalorder 2, %s24
      // Predicated region
      $region73: #{_lstm_forward.1} parent=5 // pred_check
        %p1381 = pneg %p1380
      $region74: #{_lstm_forward.1} parent=5 // pred_check_branch
        %1383 = sbr.rel (%p1381) target = $region76
      $region75: #{_lstm_forward.1} parent=5 // pred_region
        %s1384 = ssub.s32 %s24, 2
        // Predicated region
        $region77: #{_lstm_forward.1} parent=75 // pred_check
          %p1385 = pneg %p225
        $region78: #{_lstm_forward.1} parent=75 // pred_check_branch
          %1387 = sbr.rel (%p1385) target = $region80
        $region79: #{_lstm_forward.1} parent=75 // pred_region
          %s1388 = sand.u32 %s210, 1
          %s1389 = scalar_lea.sflag [#allocation6], %s1388
          %s1390 = sand.u32 %s210, 1
          %s1391 = smul.addr %s1390, 2
          %s1392 = scalar_lea.vmem [#allocation7], %s1391
          %1393 = dma.done %s1389, 32
        $region80: #{_lstm_forward.1} parent=75 // pred_fallthru
          _
        // Predicated region
        $region81: #{_lstm_forward.1} parent=75 // pred_check
          %p1394 = pneg %p251
        $region82: #{_lstm_forward.1} parent=75 // pred_check_branch
          %1396 = sbr.rel (%p1394) target = $region84
        $region83: #{_lstm_forward.1} parent=75 // pred_region
          %s1397 = sand.u32 %s236, 1
          %s1398 = scalar_lea.sflag [#allocation9], %s1397
          %s1399 = sand.u32 %s236, 1
          %s1400 = smul.addr %s1399, 2
          %s1401 = scalar_lea.vmem [#allocation8], %s1400
          %1402 = dma.done %s1398, 32
        $region84: #{_lstm_forward.1} parent=75 // pred_fallthru
          _
      $region76: #{_lstm_forward.1} parent=5 // pred_fallthru
        _
    $region6: #{_lstm_forward.1} parent=1 // loop_footer
      %s28 = sadd.s32 1, %s24
    $region7: #{_lstm_forward.1} parent=1 // loop_footer_branch
      %23 = sbr.rel target = $region3
    $region8: #{_lstm_forward.1} parent=1 // loop_exit
      _
    %1403 = vsyncpa [#allocation5], 1
    %s1404 = scalar_lea.sflag [#allocation5], 1
    %1405 = vsyncpa %s1404, 1
    %1406 = vsyncpa [#allocation6], 1
    %s1407 = scalar_lea.sflag [#allocation6], 1
    %1408 = vsyncpa %s1407, 1
    %1409 = vsyncpa [#allocation9], 1
    %s1410 = scalar_lea.sflag [#allocation9], 1
    %1411 = vsyncpa %s1410, 1

</llo_original>
